<compile_context>
chip_gen: v7x
topology: tpu7x:2x2x1
jax: 0.10.0
libtpu: 0.0.40
codegen_flags: <defaults>
</compile_context>

<pallas_src>
import jax
import jax.numpy as jnp
from jax.experimental import pallas as pl
from jax.experimental.pallas import tpu as pltpu

EPS = 1e-5
LANES = 128
_VMEM_SELECT_BUDGET = 40 * 1024 * 1024   # per-step working-set budget for tile choice
_VMEM_LIMIT_CAP = 56 * 1024 * 1024       # keep under v7x's 64 MiB physical VMEM


def _round_up(x, m):
    return (x + m - 1) // m * m


def _vmem_bytes(b, H, W, cin_p, cout_p, cd_bytes):
    """Rough per-grid-step VMEM footprint (double-buffered blocks + temps)."""
    in_blk = b * H * W * cin_p * cd_bytes
    out_blk = b * H * W * cout_p * cd_bytes
    halo = b * (H + 2) * (W + 2) * cin_p * cd_bytes
    patch = b * H * W * 9 * cin_p * cd_bytes
    y32 = b * H * W * cout_p * 4
    wgt = 9 * cin_p * cout_p * cd_bytes
    st = 2 * cout_p * 4
    return 2 * (in_blk + out_blk + st) + halo + patch + y32 + 2 * wgt


def _pick_batch_tile(N, H, W, cin_p, cout_p, cd_bytes):
    """Smallest divisor of N with matmul M = b*H*W >= 256 that fits the budget."""
    best = 1
    for b in range(1, N + 1):
        if N % b:
            continue
        est = max(_vmem_bytes(b, H, W, cin_p, cout_p, cd_bytes),
                  _vmem_bytes(b, H, W, cout_p, cout_p, cd_bytes))
        if est > _VMEM_SELECT_BUDGET:
            break
        best = b
        if b * H * W >= 256:
            break
    return best


def _make_conv_kernel(B, H, W, cin_p, cout_p, compute_dtype, bn_relu_prologue):
    """3x3 'same' conv of a (B,H,W,cin_p) NHWC tile as one fused MXU matmul.

    Optional BN+ReLU prologue (per-channel f32 scale/shift).  The spatial zero
    padding is materialised in a VMEM halo scratch so HBM intermediates stay
    unpadded and every HBM store is one full block store.  Epilogue writes the
    conv output (in y_ref.dtype) plus per-channel [sum, sum_sq] taken from the
    f32 accumulator, so BatchNorm statistics never need a separate pass.
    """

    def kernel(*refs):
        if bn_relu_prologue:
            x_ref, sc_ref, sh_ref, w_ref, y_ref, st_ref, xp_ref = refs
            a = jnp.maximum(
                x_ref[...].astype(jnp.float32) * sc_ref[...] + sh_ref[...], 0.0)
        else:
            x_ref, w_ref, y_ref, st_ref, xp_ref = refs
            a = x_ref[...]

        # Zero-padded halo tile in VMEM.  The border is rewritten to zero every
        # step so correctness does not depend on how the grid is sharded
        # across TensorCores (megacore on v7x).
        xp_ref[...] = jnp.zeros(xp_ref.shape, xp_ref.dtype)
        xp_ref[:, 1:1 + H, 1:1 + W, :] = a.astype(compute_dtype)
        xp = xp_ref[...]

        # im2col: one (B*H*W, 9*cin_p) patch in compute_dtype -> single big-K
        # MXU matmul with f32 accumulation.
        # (On v5e, 9 accumulating K=cin_p dots would avoid the 9x patch temp.)
        taps = [xp[:, dy:dy + H, dx:dx + W, :]
                for dy in range(3) for dx in range(3)]
        patch = jnp.concatenate(taps, axis=-1).reshape(B * H * W, 9 * cin_p)
        y = jnp.dot(patch, w_ref[...], preferred_element_type=jnp.float32)

        # Per-tile BatchNorm partial statistics from the f32 accumulator
        # (before any downcast), reduced over the grid outside the kernel.
        st_ref[0:1, :] = jnp.sum(y, axis=0, keepdims=True)
        st_ref[1:2, :] = jnp.sum(y * y, axis=0, keepdims=True)

        y_ref[...] = y.reshape(B, H, W, cout_p).astype(y_ref.dtype)

    return kernel


def _bn_relu_kernel(y_ref, sc_ref, sh_ref, o_ref):
    o_ref[...] = jnp.maximum(
        y_ref[...].astype(jnp.float32) * sc_ref[...] + sh_ref[...], 0.0)


def _bn_scale_shift(stats, gamma, beta, count, c_pad):
    """Fold batch mean/var (from per-tile sums) and gamma/beta into scale/shift."""
    ssum = jnp.sum(stats[:, 0, :], axis=0)
    ssq = jnp.sum(stats[:, 1, :], axis=0)
    mean = ssum / count
    var = jnp.maximum(ssq / count - mean * mean, 0.0)
    g = jnp.pad(gamma.astype(jnp.float32), (0, c_pad - gamma.shape[0]))
    b = jnp.pad(beta.astype(jnp.float32), (0, c_pad - beta.shape[0]))
    scale = g * jax.lax.rsqrt(var + EPS)       # padded channels: gamma=0 -> 0
    shift = b - mean * scale
    return scale.reshape(1, 1, 1, c_pad), shift.reshape(1, 1, 1, c_pad)


def _pack_weight(w_oihw, cin_p, cout_p, compute_dtype):
    """PyTorch OIHW -> (ky,kx,Cin,Cout), zero-pad channels, flatten to
    (9*cin_p, cout_p) matching the kernel's im2col tap ordering."""
    cout, cin = w_oihw.shape[0], w_oihw.shape[1]
    w = jnp.transpose(w_oihw, (2, 3, 1, 0)).astype(jnp.float32)
    w = jnp.pad(w, ((0, 0), (0, 0), (0, cin_p - cin), (0, cout_p - cout)))
    return w.reshape(9 * cin_p, cout_p).astype(compute_dtype)


def double_conv(x_nchw, params, *, compute_dtype=jnp.bfloat16):
    """DoubleConv forward.  x_nchw: (N, Cin, H, W) f32 -> (N, Cout, H, W) f32.

    compute_dtype controls the MXU-input dtype (bf16 default; f32 is the
    accuracy fallback).  All elementwise / BatchNorm math stays in f32.
    """
    w1, b1, g1, be1, w2, b2, g2, be2 = params
    del b1, b2  # conv bias is exactly cancelled by training-mode BatchNorm
    N, Cin, H, W = x_nchw.shape
    Cout = w1.shape[0]
    cin_p = _round_up(Cin, LANES)
    cout_p = _round_up(Cout, LANES)
    cd_bytes = jnp.dtype(compute_dtype).itemsize

    bt = _pick_batch_tile(N, H, W, cin_p, cout_p, cd_bytes)
    n_tiles = N // bt
    est = max(_vmem_bytes(bt, H, W, cin_p, cout_p, cd_bytes),
              _vmem_bytes(bt, H, W, cout_p, cout_p, cd_bytes))
    vmem_limit = int(min(_VMEM_LIMIT_CAP, max(32 * 1024 * 1024, 1.4 * est)))

    cparams = pltpu.CompilerParams(
        dimension_semantics=("parallel",),       # shards batch tiles over TCs on v7x
        vmem_limit_bytes=vmem_limit)

    # ---- layout glue (XLA): NCHW -> NHWC, lane-pad channels, one cast ----
    # (In a full NHWC model these transposes disappear; the tiny first-layer
    #  Cin is still lane-padded to 128 for MXU-friendly K.)
    x = jnp.transpose(x_nchw, (0, 2, 3, 1))
    x = jnp.pad(x, ((0, 0), (0, 0), (0, 0), (0, cin_p - Cin))).astype(compute_dtype)

    w1m = _pack_weight(w1, cin_p, cout_p, compute_dtype)
    w2m = _pack_weight(w2, cout_p, cout_p, compute_dtype)

    def img_spec(c):
        return pl.BlockSpec((bt, H, W, c), lambda t: (t, 0, 0, 0))

    def w_spec(k):
        return pl.BlockSpec((k, cout_p), lambda t: (0, 0))

    stat_spec = pl.BlockSpec((None, 2, cout_p), lambda t: (t, 0, 0))
    vec_spec = pl.BlockSpec((1, 1, 1, cout_p), lambda t: (0, 0, 0, 0))

    def halo_scratch(c):
        return pltpu.VMEM((bt, H + 2, W + 2, c), compute_dtype)

    # ---- stage 1: conv1 (+ BN1 partial stats), compute_dtype intermediate ----
    y1, st1 = pl.pallas_call(
        _make_conv_kernel(bt, H, W, cin_p, cout_p, compute_dtype,
                          bn_relu_prologue=False),
        grid=(n_tiles,),
        in_specs=[img_spec(cin_p), w_spec(9 * cin_p)],
        out_specs=(img_spec(cout_p), stat_spec),
        out_shape=(jax.ShapeDtypeStruct((N, H, W, cout_p), compute_dtype),
                   jax.ShapeDtypeStruct((n_tiles, 2, cout_p), jnp.float32)),
        scratch_shapes=[halo_scratch(cin_p)],
        compiler_params=cparams,
    )(x, w1m)

    scale1, shift1 = _bn_scale_shift(st1, g1, be1, N * H * W, cout_p)

    # ---- stage 2: fused BN1+ReLU prologue + conv2 (+ BN2 partial stats) ----
    y2, st2 = pl.pallas_call(
        _make_conv_kernel(bt, H, W, cout_p, cout_p, compute_dtype,
                          bn_relu_prologue=True),
        grid=(n_tiles,),
        in_specs=[img_spec(cout_p), vec_spec, vec_spec, w_spec(9 * cout_p)],
        out_specs=(img_spec(cout_p), stat_spec),
        out_shape=(jax.ShapeDtypeStruct((N, H, W, cout_p), compute_dtype),
                   jax.ShapeDtypeStruct((n_tiles, 2, cout_p), jnp.float32)),
        scratch_shapes=[halo_scratch(cout_p)],
        compiler_params=cparams,
    )(y1, scale1, shift1, w2m)

    scale2, shift2 = _bn_scale_shift(st2, g2, be2, N * H * W, cout_p)

    # ---- stage 3: final BN2 + ReLU (in a full net, fuse into next consumer) ----
    out = pl.pallas_call(
        _bn_relu_kernel,
        grid=(n_tiles,),
        in_specs=[img_spec(cout_p), vec_spec, vec_spec],
        out_specs=img_spec(cout_p),
        out_shape=jax.ShapeDtypeStruct((N, H, W, cout_p), jnp.float32),
        compiler_params=cparams,
    )(y2, scale2, shift2)

    # drop channel padding, NHWC -> NCHW (to match the PyTorch module's layout)
    return jnp.transpose(out[..., :Cout], (0, 3, 1, 2))


# ---------------- pure-JAX reference (for validation) ----------------
def _ref_double_conv(x, params):
    w1, b1, g1, be1, w2, b2, g2, be2 = params

    def conv(x, w, b):
        y = jax.lax.conv_general_dilated(
            x, w, window_strides=(1, 1), padding="SAME",
            dimension_numbers=("NCHW", "OIHW", "NCHW"))
        return y + b[None, :, None, None]

    def bn_relu(x, g, bt):
        mean = x.mean(axis=(0, 2, 3), keepdims=True)
        var = ((x - mean) ** 2).mean(axis=(0, 2, 3), keepdims=True)
        y = (x - mean) * jax.lax.rsqrt(var + EPS)
        y = y * g[None, :, None, None] + bt[None, :, None, None]
        return jnp.maximum(y, 0.0)

    y = bn_relu(conv(x, w1, b1), g1, be1)
    y = bn_relu(conv(y, w2, b2), g2, be2)
    return y


if __name__ == "__main__":
    N, Cin, Cout, H, W = 2, 4, 8, 16, 16
    key = jax.random.PRNGKey(0)
    kx, kw1, kb1, kw2, kb2 = jax.random.split(key, 5)

    x = jax.random.normal(kx, (N, Cin, H, W), dtype=jnp.float32)

    # deterministic parameter init (shapes match nn.Conv2d / nn.BatchNorm2d)
    w1 = 0.1 * jax.random.normal(kw1, (Cout, Cin, 3, 3), dtype=jnp.float32)
    b1 = 0.1 * jax.random.normal(kb1, (Cout,), dtype=jnp.float32)
    w2 = 0.1 * jax.random.normal(kw2, (Cout, Cout, 3, 3), dtype=jnp.float32)
    b2 = 0.1 * jax.random.normal(kb2, (Cout,), dtype=jnp.float32)
    g1 = jnp.ones((Cout,), jnp.float32)    # BatchNorm default weight
    be1 = jnp.zeros((Cout,), jnp.float32)  # BatchNorm default bias
    g2 = jnp.ones((Cout,), jnp.float32)
    be2 = jnp.zeros((Cout,), jnp.float32)
    params = (w1, b1, g1, be1, w2, b2, g2, be2)

    ref = jax.block_until_ready(_ref_double_conv(x, params))

    # Default path: bf16 MXU inputs (recommended on all generations);
    # BatchNorm / elementwise stay f32.
    out = jax.block_until_ready(double_conv(x, params))
    assert out.shape == (N, Cout, H, W)
    err_bf16 = float(jnp.max(jnp.abs(out - ref)))
    assert err_bf16 < 1.5e-1, err_bf16

    # f32 MXU-input fallback: faithful to the PyTorch fp32 forward semantics.
    out_f32 = jax.block_until_ready(
        double_conv(x, params, compute_dtype=jnp.float32))
    assert out_f32.shape == (N, Cout, H, W)
    assert jnp.allclose(out_f32, ref, atol=2e-4, rtol=2e-4), (
        float(jnp.max(jnp.abs(out_f32 - ref))))

    print("KERNEL_OK")
</pallas_src>

<mosaic_0001>
module attributes {stable_mosaic.version = 11 : i64} {
  func.func @kernel(%arg0: i32, %arg1: memref<1x16x16x128xbf16, #tpu.memory_space<vmem>>, %arg2: memref<1152x128xbf16, #tpu.memory_space<vmem>>, %arg3: memref<1x16x16x128xbf16, #tpu.memory_space<vmem>>, %arg4: memref<1x2x128xf32, #tpu.memory_space<vmem>>, %arg5: memref<1x18x18x128xbf16, #tpu.memory_space<vmem>>) attributes {dimension_semantics = [#tpu.dimension_semantics<parallel>], iteration_bounds = array<i64: 2>, scalar_prefetch = 0 : i64, scratch_operands = 1 : i64, tpu.core_type = #tpu.core_type<tc>, window_params = [{transform_indices = @transform_0, window_bounds = array<i64: 1, 16, 16, 128>}, {pipeline_mode = #tpu.pipeline_mode<synchronous>, transform_indices = @transform_1, window_bounds = array<i64: 1152, 128>}, {transform_indices = @transform_2, window_bounds = array<i64: 1, 16, 16, 128>}, {transform_indices = @transform_3, window_bounds = array<i64: 1, 2, 128>}]} {
    %c0 = arith.constant 0 : index
    %c0_0 = arith.constant 0 : index
    %c0_1 = arith.constant 0 : index
    %c0_2 = arith.constant 0 : index
    %0 = vector.load %arg1[%c0, %c0_0, %c0_1, %c0_2] : memref<1x16x16x128xbf16, #tpu.memory_space<vmem>>, vector<1x16x16x128xbf16>
    %cst = arith.constant 0.000000e+00 : bf16
    %1 = vector.broadcast %cst : bf16 to vector<1x18x18x128xbf16>
    %c0_3 = arith.constant 0 : index
    %c0_4 = arith.constant 0 : index
    %c0_5 = arith.constant 0 : index
    %c0_6 = arith.constant 0 : index
    %2 = vector.load %arg5[%c0_3, %c0_4, %c0_5, %c0_6] : memref<1x18x18x128xbf16, #tpu.memory_space<vmem>>, vector<1x18x18x128xbf16>
    tpu.vector_store %arg5[%c0_3, %c0_4, %c0_5, %c0_6], %1 {strides = array<i32>} : memref<1x18x18x128xbf16, #tpu.memory_space<vmem>>, vector<1x18x18x128xbf16>,
    %c0_7 = arith.constant 0 : index
    %c1 = arith.constant 1 : index
    %c1_8 = arith.constant 1 : index
    %c0_9 = arith.constant 0 : index
    %3 = vector.load %arg5[%c0_7, %c1, %c1_8, %c0_9] : memref<1x18x18x128xbf16, #tpu.memory_space<vmem>>, vector<1x16x16x128xbf16>
    tpu.vector_store %arg5[%c0_7, %c1, %c1_8, %c0_9], %0 {strides = array<i32>} : memref<1x18x18x128xbf16, #tpu.memory_space<vmem>>, vector<1x16x16x128xbf16>,
    %c0_10 = arith.constant 0 : index
    %c0_11 = arith.constant 0 : index
    %c0_12 = arith.constant 0 : index
    %c0_13 = arith.constant 0 : index
    %4 = vector.load %arg5[%c0_10, %c0_11, %c0_12, %c0_13] : memref<1x18x18x128xbf16, #tpu.memory_space<vmem>>, vector<1x18x18x128xbf16>
    %5 = vector.extract_strided_slice %4 {offsets = [0, 0, 0, 0], sizes = [1, 16, 16, 128], strides = [1, 1, 1, 1]} : vector<1x18x18x128xbf16> to vector<1x16x16x128xbf16>
    %6 = vector.extract_strided_slice %4 {offsets = [0, 0, 1, 0], sizes = [1, 16, 16, 128], strides = [1, 1, 1, 1]} : vector<1x18x18x128xbf16> to vector<1x16x16x128xbf16>
    %7 = vector.extract_strided_slice %4 {offsets = [0, 0, 2, 0], sizes = [1, 16, 16, 128], strides = [1, 1, 1, 1]} : vector<1x18x18x128xbf16> to vector<1x16x16x128xbf16>
    %8 = vector.extract_strided_slice %4 {offsets = [0, 1, 0, 0], sizes = [1, 16, 16, 128], strides = [1, 1, 1, 1]} : vector<1x18x18x128xbf16> to vector<1x16x16x128xbf16>
    %9 = vector.extract_strided_slice %4 {offsets = [0, 1, 1, 0], sizes = [1, 16, 16, 128], strides = [1, 1, 1, 1]} : vector<1x18x18x128xbf16> to vector<1x16x16x128xbf16>
    %10 = vector.extract_strided_slice %4 {offsets = [0, 1, 2, 0], sizes = [1, 16, 16, 128], strides = [1, 1, 1, 1]} : vector<1x18x18x128xbf16> to vector<1x16x16x128xbf16>
    %11 = vector.extract_strided_slice %4 {offsets = [0, 2, 0, 0], sizes = [1, 16, 16, 128], strides = [1, 1, 1, 1]} : vector<1x18x18x128xbf16> to vector<1x16x16x128xbf16>
    %12 = vector.extract_strided_slice %4 {offsets = [0, 2, 1, 0], sizes = [1, 16, 16, 128], strides = [1, 1, 1, 1]} : vector<1x18x18x128xbf16> to vector<1x16x16x128xbf16>
    %13 = vector.extract_strided_slice %4 {offsets = [0, 2, 2, 0], sizes = [1, 16, 16, 128], strides = [1, 1, 1, 1]} : vector<1x18x18x128xbf16> to vector<1x16x16x128xbf16>
    %14 = tpu.concatenate %5, %6, %7, %8, %9, %10, %11, %12, %13 in 3 : vector<1x16x16x128xbf16>, vector<1x16x16x128xbf16>, vector<1x16x16x128xbf16>, vector<1x16x16x128xbf16>, vector<1x16x16x128xbf16>, vector<1x16x16x128xbf16>, vector<1x16x16x128xbf16>, vector<1x16x16x128xbf16>, vector<1x16x16x128xbf16> -> vector<1x16x16x1152xbf16>
    %15 = vector.shape_cast %14 : vector<1x16x16x1152xbf16> to vector<256x1152xbf16>
    %c0_14 = arith.constant 0 : index
    %c0_15 = arith.constant 0 : index
    %16 = vector.load %arg2[%c0_14, %c0_15] : memref<1152x128xbf16, #tpu.memory_space<vmem>>, vector<1152x128xbf16>
    %cst_16 = arith.constant dense<0.000000e+00> : vector<256x128xf32>
    %17 = tpu.matmul %15, %16, %cst_16 {dimension_numbers = #tpu.dot_dimension_numbers<[1], [0], [0], [1], [0, 0, 1, 1], [], []>} : vector<256x1152xbf16>, vector<1152x128xbf16>, vector<256x128xf32> -> vector<256x128xf32>
    %cst_17 = arith.constant dense<0.000000e+00> : vector<128xf32>
    %18 = vector.multi_reduction <add>, %17, %cst_17 [0] : vector<256x128xf32> to vector<128xf32>
    %19 = vector.shape_cast %18 : vector<128xf32> to vector<1x128xf32>
    %c0_18 = arith.constant 0 : index
    %c0_19 = arith.constant 0 : index
    %c0_20 = arith.constant 0 : index
    %20 = vector.load %arg4[%c0_18, %c0_19, %c0_20] : memref<1x2x128xf32, #tpu.memory_space<vmem>>, vector<1x1x128xf32>
    %21 = vector.shape_cast %20 : vector<1x1x128xf32> to vector<1x128xf32>
    %22 = vector.shape_cast %19 : vector<1x128xf32> to vector<1x1x128xf32>
    tpu.vector_store %arg4[%c0_18, %c0_19, %c0_20], %22 {strides = array<i32>} : memref<1x2x128xf32, #tpu.memory_space<vmem>>, vector<1x1x128xf32>,
    %23 = arith.mulf %17, %17 : vector<256x128xf32>
    %cst_21 = arith.constant dense<0.000000e+00> : vector<128xf32>
    %24 = vector.multi_reduction <add>, %23, %cst_21 [0] : vector<256x128xf32> to vector<128xf32>
    %25 = vector.shape_cast %24 : vector<128xf32> to vector<1x128xf32>
    %c0_22 = arith.constant 0 : index
    %c1_23 = arith.constant 1 : index
    %c0_24 = arith.constant 0 : index
    %26 = vector.load %arg4[%c0_22, %c1_23, %c0_24] : memref<1x2x128xf32, #tpu.memory_space<vmem>>, vector<1x1x128xf32>
    %27 = vector.shape_cast %26 : vector<1x1x128xf32> to vector<1x128xf32>
    %28 = vector.shape_cast %25 : vector<1x128xf32> to vector<1x1x128xf32>
    tpu.vector_store %arg4[%c0_22, %c1_23, %c0_24], %28 {strides = array<i32>} : memref<1x2x128xf32, #tpu.memory_space<vmem>>, vector<1x1x128xf32>,
    %29 = vector.shape_cast %17 : vector<256x128xf32> to vector<1x16x16x128xf32>
    %30 = arith.truncf %29 : vector<1x16x16x128xf32> to vector<1x16x16x128xbf16>
    %c0_25 = arith.constant 0 : index
    %c0_26 = arith.constant 0 : index
    %c0_27 = arith.constant 0 : index
    %c0_28 = arith.constant 0 : index
    %31 = vector.load %arg3[%c0_25, %c0_26, %c0_27, %c0_28] : memref<1x16x16x128xbf16, #tpu.memory_space<vmem>>, vector<1x16x16x128xbf16>
    tpu.vector_store %arg3[%c0_25, %c0_26, %c0_27, %c0_28], %30 {strides = array<i32>} : memref<1x16x16x128xbf16, #tpu.memory_space<vmem>>, vector<1x16x16x128xbf16>,
    return
  }
  func.func @transform_0(%arg0: i32) -> (i32, i32, i32, i32) {
    %c0_i32 = arith.constant 0 : i32
    %c0_i32_0 = arith.constant 0 : i32
    %c0_i32_1 = arith.constant 0 : i32
    %c0_i32_2 = arith.constant 0 : i32
    return %arg0, %c0_i32, %c0_i32_0, %c0_i32_1 : i32, i32, i32, i32
  }
  func.func @transform_1(%arg0: i32) -> (i32, i32) {
    %c0_i32 = arith.constant 0 : i32
    %c0_i32_0 = arith.constant 0 : i32
    %c0_i32_1 = arith.constant 0 : i32
    return %c0_i32, %c0_i32_0 : i32, i32
  }
  func.func @transform_2(%arg0: i32) -> (i32, i32, i32, i32) {
    %c0_i32 = arith.constant 0 : i32
    %c0_i32_0 = arith.constant 0 : i32
    %c0_i32_1 = arith.constant 0 : i32
    %c0_i32_2 = arith.constant 0 : i32
    return %arg0, %c0_i32, %c0_i32_0, %c0_i32_1 : i32, i32, i32, i32
  }
  func.func @transform_3(%arg0: i32) -> (i32, i32, i32) {
    %c0_i32 = arith.constant 0 : i32
    %c0_i32_0 = arith.constant 0 : i32
    %c0_i32_1 = arith.constant 0 : i32
    return %arg0, %c0_i32, %c0_i32_0 : i32, i32, i32
  }
}

</mosaic_0001>

<llo_original>
// kernel: tpu_custom_call.1
$region0: #{tpu_custom_call.1}
  #allocation0 [shape = 'u32[]', space=smem, size = 0x4, offset = 0x4, fixed_abs, tag = 'smem constant byte address 0x4 - core index']
  #allocation1 [shape = 'u32[144,128]{1,0:T(1,128)}', space=vmem, size = 0x12000, scoped, tag = 'internal scratch']
  #allocation2 [shape = 'bf16[1,18,18,128]{3,2,1,0:T(8,128)(2,1)}', space=vmem, size = 0x1b000, scoped, tag = 'scratch operand']
  %s0 = inlined_call_operand.hbm [shape: bf16[2,16,16,128], index: 0, kind: input, shape index: {}]
  %s1 = inlined_call_operand.hbm [shape: bf16[1152,128], index: 1, kind: input, shape index: {}]
  %s2 = inlined_call_operand.hbm [shape: bf16[2,16,16,128], index: 2, kind: output, shape index: {0}]
  %s3 = inlined_call_operand.hbm [shape: f32[2,2,128], index: 3, kind: output, shape index: {1}]
  %4 = xla_tuple %s2, %s3
  %s5 = sld [smem:[#allocation0]]
  $region57: #{tpu_custom_call.1} parent=0
    _
  %s7 = ssub.s32 1, %s5
  %s8 = scalar_select 0, %s7, %s5
  $region1: #{tpu_custom_call.1} parent=0
    #allocation3 [shape = 'u8[131072]{0}', space=vmem, size = 0x20000, scoped, tag = 'input window, operand 0']
    #allocation4 [shape = 's32[2]{0}', space=sflag, size = 0x8, scoped, tag = 'scoped memory for tpu_custom_call.1']
    #allocation5 [shape = 's32[2]{0}', space=sflag, size = 0x8, scoped, tag = 'scoped memory for tpu_custom_call.1']
    #allocation6 [shape = 'u8[294912]{0}', space=vmem, size = 0x48000, scoped, tag = 'input window, operand 1, single buffered']
    #allocation7 [shape = 's32[1]{0}', space=sflag, size = 0x4, scoped, tag = 'scoped memory for tpu_custom_call.1']
    #allocation8 [shape = 'u8[131072]{0}', space=vmem, size = 0x20000, scoped, tag = 'output window, operand 0']
    #allocation9 [shape = 'u8[2048]{0}', space=vmem, size = 0x800, scoped, tag = 'output window, operand 1']
    #allocation10 [shape = 's32[2]{0}', space=sflag, size = 0x8, scoped, tag = 'scoped memory for tpu_custom_call.1']
    %9 = vsyncpa [#allocation4], 0
    %s10 = scalar_lea.sflag [#allocation4], 1
    %11 = vsyncpa %s10, 0
    %12 = vsyncpa [#allocation7], 0
    %13 = vsyncpa [#allocation5], 0
    %s14 = scalar_lea.sflag [#allocation5], 1
    %15 = vsyncpa %s14, 0
    %16 = vsyncpa [#allocation10], 0
    %s17 = scalar_lea.sflag [#allocation10], 1
    %18 = vsyncpa %s17, 0
    loop: start=0, step=1, limit=4
    $region2: #{tpu_custom_call.1} parent=1 // loop_pre_header
      _
    $region3: #{tpu_custom_call.1} parent=1 // loop_header
      %s20 = sphi 0, %s24
      %p21 = scmp.ge.s32.totalorder %s20, 4
      %s30 = sphi 0, %s32
      %s33 = sphi 0, %s30
      %s34 = sphi 0, %s33
      %s50 = sphi 0, %s34
      %s54 = sphi 0, %s54
      %s56 = sphi 0, %s54
      %s57 = sphi 0, %s56
      %s71 = sphi 0, %s57
      %s77 = sphi 0, %s79
      %s80 = sphi 0, %s77
      %s81 = sphi 0, %s80
      %s97 = sphi 0, %s81
      %s103 = sphi 0, %s105
      %s106 = sphi 0, %s103
      %s107 = sphi 0, %s106
      %s123 = sphi 0, %s107
    $region4: #{tpu_custom_call.1} parent=1 // loop_header_branch
      %23 = sbr.rel (%p21) target = $region8
    $region5: #{tpu_custom_call.1} parent=1 // loop_body
      %s25 = ssub.s32 %s20, 1
      %s26 = ssub.s32 %s20, 2
      %s27 = sadd.s32 %s20, 1
      %s28 = ssub.s32 %s20, %s27
      %p29 = scmp.eq.s32.totalorder %s28, 0
      %s31 = sadd.s32 %s30, 1
      %s32 = scalar_select %p29, %s30, %s31
      %p35 = pneg %p29
      %p36 = scmp.eq.s32.totalorder %s20, 1
      %p37 = por %p35, %p36
      %p38 = scmp.ne.s32.totalorder %s30, %s33
      %p39 = scmp.eq.s32.totalorder %s20, 0
      %p40 = por %p38, %p39
      %p41 = scmp.ne.s32.totalorder %s30, %s33
      %p42 = scmp.eq.s32.totalorder %s25, 1
      %p43 = por %p41, %p42
      %p44 = scmp.ne.s32.totalorder %s33, %s34
      %p45 = scmp.eq.s32.totalorder %s25, 0
      %p46 = por %p44, %p45
      %p47 = scmp.ne.s32.totalorder %s33, %s34
      %p48 = scmp.eq.s32.totalorder %s26, 1
      %p49 = por %p47, %p48
      %p51 = scmp.ne.s32.totalorder %s34, %s50
      %p52 = scmp.eq.s32.totalorder %s26, 0
      %p53 = por %p51, %p52
      %s55 = sadd.s32 %s54, 1
      %p58 = scmp.eq.s32.totalorder %s20, 1
      %p59 = scmp.ne.s32.totalorder %s54, %s56
      %p60 = scmp.eq.s32.totalorder %s20, 0
      %p61 = por %p59, %p60
      %p62 = scmp.ne.s32.totalorder %s54, %s56
      %p63 = scmp.eq.s32.totalorder %s25, 1
      %p64 = por %p62, %p63
      %p65 = scmp.ne.s32.totalorder %s56, %s57
      %p66 = scmp.eq.s32.totalorder %s25, 0
      %p67 = por %p65, %p66
      %p68 = scmp.ne.s32.totalorder %s56, %s57
      %p69 = scmp.eq.s32.totalorder %s26, 1
      %p70 = por %p68, %p69
      %p72 = scmp.ne.s32.totalorder %s57, %s71
      %p73 = scmp.eq.s32.totalorder %s26, 0
      %p74 = por %p72, %p73
      %s75 = ssub.s32 %s20, %s27
      %p76 = scmp.eq.s32.totalorder %s75, 0
      %s78 = sadd.s32 %s77, 1
      %s79 = scalar_select %p76, %s77, %s78
      %p82 = pneg %p76
      %p83 = scmp.eq.s32.totalorder %s20, 1
      %p84 = por %p82, %p83
      %p85 = scmp.ne.s32.totalorder %s77, %s80
      %p86 = scmp.eq.s32.totalorder %s20, 0
      %p87 = por %p85, %p86
      %p88 = scmp.ne.s32.totalorder %s77, %s80
      %p89 = scmp.eq.s32.totalorder %s25, 1
      %p90 = por %p88, %p89
      %p91 = scmp.ne.s32.totalorder %s80, %s81
      %p92 = scmp.eq.s32.totalorder %s25, 0
      %p93 = por %p91, %p92
      %p94 = scmp.ne.s32.totalorder %s80, %s81
      %p95 = scmp.eq.s32.totalorder %s26, 1
      %p96 = por %p94, %p95
      %p98 = scmp.ne.s32.totalorder %s81, %s97
      %p99 = scmp.eq.s32.totalorder %s26, 0
      %p100 = por %p98, %p99
      %s101 = ssub.s32 %s20, %s27
      %p102 = scmp.eq.s32.totalorder %s101, 0
      %s104 = sadd.s32 %s103, 1
      %s105 = scalar_select %p102, %s103, %s104
      %p108 = pneg %p102
      %p109 = scmp.eq.s32.totalorder %s20, 1
      %p110 = por %p108, %p109
      %p111 = scmp.ne.s32.totalorder %s103, %s106
      %p112 = scmp.eq.s32.totalorder %s20, 0
      %p113 = por %p111, %p112
      %p114 = scmp.ne.s32.totalorder %s103, %s106
      %p115 = scmp.eq.s32.totalorder %s25, 1
      %p116 = por %p114, %p115
      %p117 = scmp.ne.s32.totalorder %s106, %s107
      %p118 = scmp.eq.s32.totalorder %s25, 0
      %p119 = por %p117, %p118
      %p120 = scmp.ne.s32.totalorder %s106, %s107
      %p121 = scmp.eq.s32.totalorder %s26, 1
      %p122 = por %p120, %p121
      %p124 = scmp.ne.s32.totalorder %s107, %s123
      %p125 = scmp.eq.s32.totalorder %s26, 0
      %p126 = por %p124, %p125
      %p127 = scmp.le.s32.totalorder 1, %s20
      %p128 = scmp.lt.s32.totalorder %s20, 3
      %p129 = pnand %p127, %p128
      %p130 = pneg %p129
      // Predicated region
      $region9: #{tpu_custom_call.1} parent=5 // pred_check
        _
      $region10: #{tpu_custom_call.1} parent=5 // pred_check_branch
        %132 = sbr.rel (%p129) target = $region12
      $region11: #{tpu_custom_call.1} parent=5 // pred_region
        %s133 = ssub.s32 %s20, 1
        // Predicated region
        $region13: #{tpu_custom_call.1} parent=11 // pred_check
          %p134 = pneg %p67
        $region14: #{tpu_custom_call.1} parent=11 // pred_check_branch
          %136 = sbr.rel (%p134) target = $region16
        $region15: #{tpu_custom_call.1} parent=11 // pred_region
          %s138 = ssub.s32 9216, 9216
          %139 = vsyncadd [#allocation7], %s138
          %s140 = sshll.u32 [#allocation6], 4
          %s141 = int_to_ptr.vmem [resolvable:$true] %s140
          %146 = dma.hbm_to_vmem [thread:$0]  %s1, 9216, %s141, [#allocation7], 64, 64, 4
        $region16: #{tpu_custom_call.1} parent=11 // pred_fallthru
          _
      $region12: #{tpu_custom_call.1} parent=5 // pred_fallthru
        _
      %p147 = scmp.lt.s32.totalorder %s20, 2
      // Predicated region
      $region17: #{tpu_custom_call.1} parent=5 // pred_check
        %p148 = pneg %p147
      $region18: #{tpu_custom_call.1} parent=5 // pred_check_branch
        %150 = sbr.rel (%p148) target = $region20
      $region19: #{tpu_custom_call.1} parent=5 // pred_region
        // Predicated region
        $region21: #{tpu_custom_call.1} parent=19 // pred_check
          %p151 = pneg %p40
        $region22: #{tpu_custom_call.1} parent=19 // pred_check_branch
          %153 = sbr.rel (%p151) target = $region24
        $region23: #{tpu_custom_call.1} parent=19 // pred_region
          %s154 = sand.u32 %s30, 1
          %s155 = scalar_lea.sflag [#allocation4], %s154
          %s156 = sand.u32 %s30, 1
          %s157 = smul.addr %s156, 128
          %s158 = scalar_lea.vmem [#allocation3], %s157
          %s160 = ssub.s32 2048, 2048
          %161 = vsyncadd %s155, %s160
          %s162 = smul.addr %s20, 32
          %s163 = smul.addr %s162, 64
          %s164 = scalar_lea.hbm %s0, %s163
          %s165 = sshll.u32 %s158, 4
          %s166 = int_to_ptr.vmem [resolvable:$true] %s165
          %171 = dma.hbm_to_vmem [thread:$0]  %s164, 2048, %s166, %s155, 64, 64, 4
        $region24: #{tpu_custom_call.1} parent=19 // pred_fallthru
          _
      $region20: #{tpu_custom_call.1} parent=5 // pred_fallthru
        _
      %p172 = scmp.le.s32.totalorder 1, %s20
      %p173 = scmp.lt.s32.totalorder %s20, 3
      %p174 = pnand %p172, %p173
      %p175 = pneg %p174
      // Predicated region
      $region25: #{tpu_custom_call.1} parent=5 // pred_check
        _
      $region26: #{tpu_custom_call.1} parent=5 // pred_check_branch
        %177 = sbr.rel (%p174) target = $region28
      $region27: #{tpu_custom_call.1} parent=5 // pred_region
        %s178 = ssub.s32 %s20, 1
        %s179 = sand.u32 %s33, 1
        %s180 = scalar_lea.sflag [#allocation4], %s179
        %s181 = sand.u32 %s33, 1
        %s182 = smul.addr %s181, 128
        %s183 = scalar_lea.vmem [#allocation3], %s182
        // Predicated region
        $region29: #{tpu_custom_call.1} parent=27 // pred_check
          %p184 = pneg %p46
        $region30: #{tpu_custom_call.1} parent=27 // pred_check_branch
          %186 = sbr.rel (%p184) target = $region32
        $region31: #{tpu_custom_call.1} parent=27 // pred_region
          %187 = dma.done %s180, 2048
        $region32: #{tpu_custom_call.1} parent=27 // pred_fallthru
          _
        // Predicated region
        $region33: #{tpu_custom_call.1} parent=27 // pred_check
          %p188 = pneg %p67
        $region34: #{tpu_custom_call.1} parent=27 // pred_check_branch
          %190 = sbr.rel (%p188) target = $region36
        $region35: #{tpu_custom_call.1} parent=27 // pred_region
          %191 = dma.done [#allocation7], 9216
        $region36: #{tpu_custom_call.1} parent=27 // pred_fallthru
          _
        %s192 = sand.u32 %s33, 1
        %s193 = scalar_lea.sflag [#allocation4], %s192
        %s194 = sand.u32 %s33, 1
        %s195 = smul.addr %s194, 128
        %s196 = scalar_lea.vmem [#allocation3], %s195
        %p197 = pneg %p46
        %p198 = pneg %p43
        %p199 = pneg %p67
        %p200 = pneg %p64
        %p201 = pneg %p93
        %p202 = pneg %p90
        %s203 = sand.u32 %s80, 1
        %s204 = scalar_lea.sflag [#allocation5], %s203
        %s205 = sand.u32 %s80, 1
        %s206 = smul.addr %s205, 128
        %s207 = scalar_lea.vmem [#allocation8], %s206
        %p208 = pneg %p119
        %p209 = pneg %p116
        %s210 = sand.u32 %s106, 1
        %s211 = scalar_lea.sflag [#allocation10], %s210
        %s212 = sand.u32 %s106, 1
        %s213 = smul.addr %s212, 2
        %s214 = scalar_lea.vmem [#allocation9], %s213
        %v216 = vld [vmem:[%s183] sm:$0xf]
        %v217 = vld [vmem:[%s183 + $0x4] sm:$0xf]
        %v218 = vld [vmem:[%s183 + $0x8] sm:$0xf]
        %v219 = vld [vmem:[%s183 + $0xc] sm:$0xf]
        %v220 = vld [vmem:[%s183 + $0x10] sm:$0xf]
        %v221 = vld [vmem:[%s183 + $0x14] sm:$0xf]
        %v222 = vld [vmem:[%s183 + $0x18] sm:$0xf]
        %v223 = vld [vmem:[%s183 + $0x1c] sm:$0xf]
        %v224 = vld [vmem:[%s183 + $0x20] sm:$0xf]
        %v225 = vld [vmem:[%s183 + $0x24] sm:$0xf]
        %v226 = vld [vmem:[%s183 + $0x28] sm:$0xf]
        %v227 = vld [vmem:[%s183 + $0x2c] sm:$0xf]
        %v228 = vld [vmem:[%s183 + $0x30] sm:$0xf]
        %v229 = vld [vmem:[%s183 + $0x34] sm:$0xf]
        %v230 = vld [vmem:[%s183 + $0x38] sm:$0xf]
        %v231 = vld [vmem:[%s183 + $0x3c] sm:$0xf]
        %v232 = vld [vmem:[%s183 + $0x40] sm:$0xf]
        %v233 = vld [vmem:[%s183 + $0x44] sm:$0xf]
        %v234 = vld [vmem:[%s183 + $0x48] sm:$0xf]
        %v235 = vld [vmem:[%s183 + $0x4c] sm:$0xf]
        %v236 = vld [vmem:[%s183 + $0x50] sm:$0xf]
        %v237 = vld [vmem:[%s183 + $0x54] sm:$0xf]
        %v238 = vld [vmem:[%s183 + $0x58] sm:$0xf]
        %v239 = vld [vmem:[%s183 + $0x5c] sm:$0xf]
        %v240 = vld [vmem:[%s183 + $0x60] sm:$0xf]
        %v241 = vld [vmem:[%s183 + $0x64] sm:$0xf]
        %v242 = vld [vmem:[%s183 + $0x68] sm:$0xf]
        %v243 = vld [vmem:[%s183 + $0x6c] sm:$0xf]
        %v244 = vld [vmem:[%s183 + $0x70] sm:$0xf]
        %v245 = vld [vmem:[%s183 + $0x74] sm:$0xf]
        %v246 = vld [vmem:[%s183 + $0x78] sm:$0xf]
        %v247 = vld [vmem:[%s183 + $0x7c] sm:$0xf]
        %248 = vst [vmem:[#allocation2] sm:$0xf] 0
        %249 = vst [vmem:[#allocation2 + $0x4] sm:$0xf] 0
        %250 = vst [vmem:[#allocation2 + $0x8] sm:$0x1] 0
        %251 = vst [vmem:[#allocation2 + $0xc] sm:$0xf] 0
        %252 = vst [vmem:[#allocation2 + $0x10] sm:$0xf] 0
        %253 = vst [vmem:[#allocation2 + $0x14] sm:$0x1] 0
        %254 = vst [vmem:[#allocation2 + $0x18] sm:$0xf] 0
        %255 = vst [vmem:[#allocation2 + $0x1c] sm:$0xf] 0
        %256 = vst [vmem:[#allocation2 + $0x20] sm:$0x1] 0
        %257 = vst [vmem:[#allocation2 + $0x24] sm:$0xf] 0
        %258 = vst [vmem:[#allocation2 + $0x28] sm:$0xf] 0
        %259 = vst [vmem:[#allocation2 + $0x2c] sm:$0x1] 0
        %260 = vst [vmem:[#allocation2 + $0x30] sm:$0xf] 0
        %261 = vst [vmem:[#allocation2 + $0x34] sm:$0xf] 0
        %262 = vst [vmem:[#allocation2 + $0x38] sm:$0x1] 0
        %263 = vst [vmem:[#allocation2 + $0x3c] sm:$0xf] 0
        %264 = vst [vmem:[#allocation2 + $0x40] sm:$0xf] 0
        %265 = vst [vmem:[#allocation2 + $0x44] sm:$0x1] 0
        %266 = vst [vmem:[#allocation2 + $0x48] sm:$0xf] 0
        %267 = vst [vmem:[#allocation2 + $0x4c] sm:$0xf] 0
        %268 = vst [vmem:[#allocation2 + $0x50] sm:$0x1] 0
        %269 = vst [vmem:[#allocation2 + $0x54] sm:$0xf] 0
        %270 = vst [vmem:[#allocation2 + $0x58] sm:$0xf] 0
        %271 = vst [vmem:[#allocation2 + $0x5c] sm:$0x1] 0
        %272 = vst [vmem:[#allocation2 + $0x60] sm:$0xf] 0
        %273 = vst [vmem:[#allocation2 + $0x64] sm:$0xf] 0
        %274 = vst [vmem:[#allocation2 + $0x68] sm:$0x1] 0
        %275 = vst [vmem:[#allocation2 + $0x6c] sm:$0xf] 0
        %276 = vst [vmem:[#allocation2 + $0x70] sm:$0xf] 0
        %277 = vst [vmem:[#allocation2 + $0x74] sm:$0x1] 0
        %278 = vst [vmem:[#allocation2 + $0x78] sm:$0xf] 0
        %279 = vst [vmem:[#allocation2 + $0x7c] sm:$0xf] 0
        %280 = vst [vmem:[#allocation2 + $0x80] sm:$0x1] 0
        %281 = vst [vmem:[#allocation2 + $0x84] sm:$0xf] 0
        %282 = vst [vmem:[#allocation2 + $0x88] sm:$0xf] 0
        %283 = vst [vmem:[#allocation2 + $0x8c] sm:$0x1] 0
        %284 = vst [vmem:[#allocation2 + $0x90] sm:$0xf] 0
        %285 = vst [vmem:[#allocation2 + $0x94] sm:$0xf] 0
        %286 = vst [vmem:[#allocation2 + $0x98] sm:$0x1] 0
        %287 = vst [vmem:[#allocation2 + $0x9c] sm:$0xf] 0
        %288 = vst [vmem:[#allocation2 + $0xa0] sm:$0xf] 0
        %289 = vst [vmem:[#allocation2 + $0xa4] sm:$0x1] 0
        %290 = vst [vmem:[#allocation2 + $0xa8] sm:$0xf] 0
        %291 = vst [vmem:[#allocation2 + $0xac] sm:$0xf] 0
        %292 = vst [vmem:[#allocation2 + $0xb0] sm:$0x1] 0
        %293 = vst [vmem:[#allocation2 + $0xb4] sm:$0xf] 0
        %294 = vst [vmem:[#allocation2 + $0xb8] sm:$0xf] 0
        %295 = vst [vmem:[#allocation2 + $0xbc] sm:$0x1] 0
        %296 = vst [vmem:[#allocation2 + $0xc0] sm:$0xf] 0
        %297 = vst [vmem:[#allocation2 + $0xc4] sm:$0xf] 0
        %298 = vst [vmem:[#allocation2 + $0xc8] sm:$0x1] 0
        %299 = vst [vmem:[#allocation2 + $0xcc] sm:$0xf] 0
        %300 = vst [vmem:[#allocation2 + $0xd0] sm:$0xf] 0
        %301 = vst [vmem:[#allocation2 + $0xd4] sm:$0x1] 0
        %vm302 = vsmask.f32 256
        %vm303 = vsmask.f32 4368
        %vm304 = vmor %vm302, %vm303
        %v306 = vshrl.u32 %v216, 16
        %v308 = vrot.slane %v306, 7
        %v309 = vshll.u32 %v216, 16
        %v311 = vor.u32 %v308, %v309
        %v312 = vrot.slane %v308, 4
        %v314 = vshrl.u32 %v217, 16
        %v316 = vrot.slane %v314, 7
        %v317 = vshll.u32 %v217, 16
        %v319 = vor.u32 %v316, %v317
        %v320 = vsel %vm304, %v312, %v319
        %v321 = vrot.slane %v316, 4
        %v323 = vshrl.u32 %v218, 16
        %v325 = vrot.slane %v323, 7
        %v326 = vshll.u32 %v218, 16
        %v328 = vor.u32 %v325, %v326
        %v329 = vrot.slane %v325, 4
        %v331 = vshrl.u32 %v219, 16
        %v333 = vrot.slane %v331, 7
        %v334 = vshll.u32 %v219, 16
        %v336 = vor.u32 %v333, %v334
        %v337 = vsel %vm304, %v329, %v336
        %v338 = vrot.slane %v333, 4
        %v340 = vshrl.u32 %v220, 16
        %v342 = vrot.slane %v340, 7
        %v343 = vshll.u32 %v220, 16
        %v345 = vor.u32 %v342, %v343
        %v346 = vrot.slane %v342, 4
        %v348 = vshrl.u32 %v221, 16
        %v350 = vrot.slane %v348, 7
        %v351 = vshll.u32 %v221, 16
        %v353 = vor.u32 %v350, %v351
        %v354 = vsel %vm304, %v346, %v353
        %v355 = vrot.slane %v350, 4
        %v357 = vshrl.u32 %v222, 16
        %v359 = vrot.slane %v357, 7
        %v360 = vshll.u32 %v222, 16
        %v362 = vor.u32 %v359, %v360
        %v363 = vrot.slane %v359, 4
        %v365 = vshrl.u32 %v223, 16
        %v367 = vrot.slane %v365, 7
        %v368 = vshll.u32 %v223, 16
        %v370 = vor.u32 %v367, %v368
        %v371 = vsel %vm304, %v363, %v370
        %v372 = vrot.slane %v367, 4
        %v374 = vshrl.u32 %v224, 16
        %v376 = vrot.slane %v374, 7
        %v377 = vshll.u32 %v224, 16
        %v379 = vor.u32 %v376, %v377
        %v380 = vrot.slane %v376, 4
        %v382 = vshrl.u32 %v225, 16
        %v384 = vrot.slane %v382, 7
        %v385 = vshll.u32 %v225, 16
        %v387 = vor.u32 %v384, %v385
        %v388 = vsel %vm304, %v380, %v387
        %v389 = vrot.slane %v384, 4
        %v391 = vshrl.u32 %v226, 16
        %v393 = vrot.slane %v391, 7
        %v394 = vshll.u32 %v226, 16
        %v396 = vor.u32 %v393, %v394
        %v397 = vrot.slane %v393, 4
        %v399 = vshrl.u32 %v227, 16
        %v401 = vrot.slane %v399, 7
        %v402 = vshll.u32 %v227, 16
        %v404 = vor.u32 %v401, %v402
        %v405 = vsel %vm304, %v397, %v404
        %v406 = vrot.slane %v401, 4
        %v408 = vshrl.u32 %v228, 16
        %v410 = vrot.slane %v408, 7
        %v411 = vshll.u32 %v228, 16
        %v413 = vor.u32 %v410, %v411
        %v414 = vrot.slane %v410, 4
        %v416 = vshrl.u32 %v229, 16
        %v418 = vrot.slane %v416, 7
        %v419 = vshll.u32 %v229, 16
        %v421 = vor.u32 %v418, %v419
        %v422 = vsel %vm304, %v414, %v421
        %v423 = vrot.slane %v418, 4
        %v425 = vshrl.u32 %v230, 16
        %v427 = vrot.slane %v425, 7
        %v428 = vshll.u32 %v230, 16
        %v430 = vor.u32 %v427, %v428
        %v431 = vrot.slane %v427, 4
        %v433 = vshrl.u32 %v231, 16
        %v435 = vrot.slane %v433, 7
        %v436 = vshll.u32 %v231, 16
        %v438 = vor.u32 %v435, %v436
        %v439 = vsel %vm304, %v431, %v438
        %v440 = vrot.slane %v435, 4
        %v442 = vshrl.u32 %v232, 16
        %v444 = vrot.slane %v442, 7
        %v445 = vshll.u32 %v232, 16
        %v447 = vor.u32 %v444, %v445
        %v448 = vrot.slane %v444, 4
        %v450 = vshrl.u32 %v233, 16
        %v452 = vrot.slane %v450, 7
        %v453 = vshll.u32 %v233, 16
        %v455 = vor.u32 %v452, %v453
        %v456 = vsel %vm304, %v448, %v455
        %v457 = vrot.slane %v452, 4
        %v459 = vshrl.u32 %v234, 16
        %v461 = vrot.slane %v459, 7
        %v462 = vshll.u32 %v234, 16
        %v464 = vor.u32 %v461, %v462
        %v465 = vrot.slane %v461, 4
        %v467 = vshrl.u32 %v235, 16
        %v469 = vrot.slane %v467, 7
        %v470 = vshll.u32 %v235, 16
        %v472 = vor.u32 %v469, %v470
        %v473 = vsel %vm304, %v465, %v472
        %v474 = vrot.slane %v469, 4
        %v476 = vshrl.u32 %v236, 16
        %v478 = vrot.slane %v476, 7
        %v479 = vshll.u32 %v236, 16
        %v481 = vor.u32 %v478, %v479
        %v482 = vrot.slane %v478, 4
        %v484 = vshrl.u32 %v237, 16
        %v486 = vrot.slane %v484, 7
        %v487 = vshll.u32 %v237, 16
        %v489 = vor.u32 %v486, %v487
        %v490 = vsel %vm304, %v482, %v489
        %v491 = vrot.slane %v486, 4
        %v493 = vshrl.u32 %v238, 16
        %v495 = vrot.slane %v493, 7
        %v496 = vshll.u32 %v238, 16
        %v498 = vor.u32 %v495, %v496
        %v499 = vrot.slane %v495, 4
        %v501 = vshrl.u32 %v239, 16
        %v503 = vrot.slane %v501, 7
        %v504 = vshll.u32 %v239, 16
        %v506 = vor.u32 %v503, %v504
        %v507 = vsel %vm304, %v499, %v506
        %v508 = vrot.slane %v503, 4
        %v510 = vshrl.u32 %v240, 16
        %v512 = vrot.slane %v510, 7
        %v513 = vshll.u32 %v240, 16
        %v515 = vor.u32 %v512, %v513
        %v516 = vrot.slane %v512, 4
        %v518 = vshrl.u32 %v241, 16
        %v520 = vrot.slane %v518, 7
        %v521 = vshll.u32 %v241, 16
        %v523 = vor.u32 %v520, %v521
        %v524 = vsel %vm304, %v516, %v523
        %v525 = vrot.slane %v520, 4
        %v527 = vshrl.u32 %v242, 16
        %v529 = vrot.slane %v527, 7
        %v530 = vshll.u32 %v242, 16
        %v532 = vor.u32 %v529, %v530
        %v533 = vrot.slane %v529, 4
        %v535 = vshrl.u32 %v243, 16
        %v537 = vrot.slane %v535, 7
        %v538 = vshll.u32 %v243, 16
        %v540 = vor.u32 %v537, %v538
        %v541 = vsel %vm304, %v533, %v540
        %v542 = vrot.slane %v537, 4
        %v544 = vshrl.u32 %v244, 16
        %v546 = vrot.slane %v544, 7
        %v547 = vshll.u32 %v244, 16
        %v549 = vor.u32 %v546, %v547
        %v550 = vrot.slane %v546, 4
        %v552 = vshrl.u32 %v245, 16
        %v554 = vrot.slane %v552, 7
        %v555 = vshll.u32 %v245, 16
        %v557 = vor.u32 %v554, %v555
        %v558 = vsel %vm304, %v550, %v557
        %v559 = vrot.slane %v554, 4
        %v561 = vshrl.u32 %v246, 16
        %v563 = vrot.slane %v561, 7
        %v564 = vshll.u32 %v246, 16
        %v566 = vor.u32 %v563, %v564
        %v567 = vrot.slane %v563, 4
        %v569 = vshrl.u32 %v247, 16
        %v571 = vrot.slane %v569, 7
        %v572 = vshll.u32 %v247, 16
        %v574 = vor.u32 %v571, %v572
        %v575 = vsel %vm304, %v567, %v574
        %v576 = vrot.slane %v571, 4
        %s625 = scalar_lea.vmem [#allocation2], 12
        %vm626 = vcmask 1043456
        %vm627 = vsmask.f32 7938
        %vm628 = vmand %vm626, %vm627
        %v629 = vld [vmem:[%s625] sm:$0xf]
        %v630 = vsel %vm628, %v311, %v629
        %631 = vst [vmem:[%s625] sm:$0xf] %v630
        %632 = vst [vmem:[%s625 + $0x4] sm:$0xf] %v320
        %vm633 = vcmask 1040384
        %vm634 = vmand %vm633, %vm302
        %v635 = vld [vmem:[%s625 + $0x8] sm:$0x1]
        %v636 = vsel %vm634, %v321, %v635
        %637 = vst [vmem:[%s625 + $0x8] sm:$0x1] %v636
        %v638 = vld [vmem:[%s625 + $0xc] sm:$0xf]
        %v639 = vsel %vm628, %v328, %v638
        %640 = vst [vmem:[%s625 + $0xc] sm:$0xf] %v639
        %641 = vst [vmem:[%s625 + $0x10] sm:$0xf] %v337
        %v642 = vld [vmem:[%s625 + $0x14] sm:$0x1]
        %v643 = vsel %vm634, %v338, %v642
        %644 = vst [vmem:[%s625 + $0x14] sm:$0x1] %v643
        %v645 = vld [vmem:[%s625 + $0x18] sm:$0xf]
        %v646 = vsel %vm628, %v345, %v645
        %647 = vst [vmem:[%s625 + $0x18] sm:$0xf] %v646
        %648 = vst [vmem:[%s625 + $0x1c] sm:$0xf] %v354
        %v649 = vld [vmem:[%s625 + $0x20] sm:$0x1]
        %v650 = vsel %vm634, %v355, %v649
        %651 = vst [vmem:[%s625 + $0x20] sm:$0x1] %v650
        %v652 = vld [vmem:[%s625 + $0x24] sm:$0xf]
        %v653 = vsel %vm628, %v362, %v652
        %654 = vst [vmem:[%s625 + $0x24] sm:$0xf] %v653
        %655 = vst [vmem:[%s625 + $0x28] sm:$0xf] %v371
        %v656 = vld [vmem:[%s625 + $0x2c] sm:$0x1]
        %v657 = vsel %vm634, %v372, %v656
        %658 = vst [vmem:[%s625 + $0x2c] sm:$0x1] %v657
        %v659 = vld [vmem:[%s625 + $0x30] sm:$0xf]
        %v660 = vsel %vm628, %v379, %v659
        %661 = vst [vmem:[%s625 + $0x30] sm:$0xf] %v660
        %662 = vst [vmem:[%s625 + $0x34] sm:$0xf] %v388
        %v663 = vld [vmem:[%s625 + $0x38] sm:$0x1]
        %v664 = vsel %vm634, %v389, %v663
        %665 = vst [vmem:[%s625 + $0x38] sm:$0x1] %v664
        %v666 = vld [vmem:[%s625 + $0x3c] sm:$0xf]
        %v667 = vsel %vm628, %v396, %v666
        %668 = vst [vmem:[%s625 + $0x3c] sm:$0xf] %v667
        %669 = vst [vmem:[%s625 + $0x40] sm:$0xf] %v405
        %v670 = vld [vmem:[%s625 + $0x44] sm:$0x1]
        %v671 = vsel %vm634, %v406, %v670
        %672 = vst [vmem:[%s625 + $0x44] sm:$0x1] %v671
        %v673 = vld [vmem:[%s625 + $0x48] sm:$0xf]
        %v674 = vsel %vm628, %v413, %v673
        %675 = vst [vmem:[%s625 + $0x48] sm:$0xf] %v674
        %676 = vst [vmem:[%s625 + $0x4c] sm:$0xf] %v422
        %v677 = vld [vmem:[%s625 + $0x50] sm:$0x1]
        %v678 = vsel %vm634, %v423, %v677
        %679 = vst [vmem:[%s625 + $0x50] sm:$0x1] %v678
        %v680 = vld [vmem:[%s625 + $0x54] sm:$0xf]
        %v681 = vsel %vm628, %v430, %v680
        %682 = vst [vmem:[%s625 + $0x54] sm:$0xf] %v681
        %683 = vst [vmem:[%s625 + $0x58] sm:$0xf] %v439
        %v684 = vld [vmem:[%s625 + $0x5c] sm:$0x1]
        %v685 = vsel %vm634, %v440, %v684
        %686 = vst [vmem:[%s625 + $0x5c] sm:$0x1] %v685
        %v687 = vld [vmem:[%s625 + $0x60] sm:$0xf]
        %v688 = vsel %vm628, %v447, %v687
        %689 = vst [vmem:[%s625 + $0x60] sm:$0xf] %v688
        %690 = vst [vmem:[%s625 + $0x64] sm:$0xf] %v456
        %v691 = vld [vmem:[%s625 + $0x68] sm:$0x1]
        %v692 = vsel %vm634, %v457, %v691
        %693 = vst [vmem:[%s625 + $0x68] sm:$0x1] %v692
        %v694 = vld [vmem:[%s625 + $0x6c] sm:$0xf]
        %v695 = vsel %vm628, %v464, %v694
        %696 = vst [vmem:[%s625 + $0x6c] sm:$0xf] %v695
        %697 = vst [vmem:[%s625 + $0x70] sm:$0xf] %v473
        %v698 = vld [vmem:[%s625 + $0x74] sm:$0x1]
        %v699 = vsel %vm634, %v474, %v698
        %700 = vst [vmem:[%s625 + $0x74] sm:$0x1] %v699
        %v701 = vld [vmem:[%s625 + $0x78] sm:$0xf]
        %v702 = vsel %vm628, %v481, %v701
        %703 = vst [vmem:[%s625 + $0x78] sm:$0xf] %v702
        %704 = vst [vmem:[%s625 + $0x7c] sm:$0xf] %v490
        %v705 = vld [vmem:[%s625 + $0x80] sm:$0x1]
        %v706 = vsel %vm634, %v491, %v705
        %707 = vst [vmem:[%s625 + $0x80] sm:$0x1] %v706
        %v708 = vld [vmem:[%s625 + $0x84] sm:$0xf]
        %v709 = vsel %vm628, %v498, %v708
        %710 = vst [vmem:[%s625 + $0x84] sm:$0xf] %v709
        %711 = vst [vmem:[%s625 + $0x88] sm:$0xf] %v507
        %v712 = vld [vmem:[%s625 + $0x8c] sm:$0x1]
        %v713 = vsel %vm634, %v508, %v712
        %714 = vst [vmem:[%s625 + $0x8c] sm:$0x1] %v713
        %v715 = vld [vmem:[%s625 + $0x90] sm:$0xf]
        %v716 = vsel %vm628, %v515, %v715
        %717 = vst [vmem:[%s625 + $0x90] sm:$0xf] %v716
        %718 = vst [vmem:[%s625 + $0x94] sm:$0xf] %v524
        %v719 = vld [vmem:[%s625 + $0x98] sm:$0x1]
        %v720 = vsel %vm634, %v525, %v719
        %721 = vst [vmem:[%s625 + $0x98] sm:$0x1] %v720
        %v722 = vld [vmem:[%s625 + $0x9c] sm:$0xf]
        %v723 = vsel %vm628, %v532, %v722
        %724 = vst [vmem:[%s625 + $0x9c] sm:$0xf] %v723
        %725 = vst [vmem:[%s625 + $0xa0] sm:$0xf] %v541
        %v726 = vld [vmem:[%s625 + $0xa4] sm:$0x1]
        %v727 = vsel %vm634, %v542, %v726
        %728 = vst [vmem:[%s625 + $0xa4] sm:$0x1] %v727
        %v729 = vld [vmem:[%s625 + $0xa8] sm:$0xf]
        %v730 = vsel %vm628, %v549, %v729
        %731 = vst [vmem:[%s625 + $0xa8] sm:$0xf] %v730
        %732 = vst [vmem:[%s625 + $0xac] sm:$0xf] %v558
        %v733 = vld [vmem:[%s625 + $0xb0] sm:$0x1]
        %v734 = vsel %vm634, %v559, %v733
        %735 = vst [vmem:[%s625 + $0xb0] sm:$0x1] %v734
        %v736 = vld [vmem:[%s625 + $0xb4] sm:$0xf]
        %v737 = vsel %vm628, %v566, %v736
        %738 = vst [vmem:[%s625 + $0xb4] sm:$0xf] %v737
        %739 = vst [vmem:[%s625 + $0xb8] sm:$0xf] %v575
        %v740 = vld [vmem:[%s625 + $0xbc] sm:$0x1]
        %v741 = vsel %vm634, %v576, %v740
        %742 = vst [vmem:[%s625 + $0xbc] sm:$0x1] %v741
        %v743 = vld [vmem:[#allocation2] sm:$0xf]
        %v744 = vld [vmem:[#allocation2 + $0x4] sm:$0xf]
        %v745 = vld [vmem:[#allocation2 + $0x8] sm:$0x1]
        %v746 = vld [vmem:[#allocation2 + $0xc] sm:$0xf]
        %v747 = vld [vmem:[#allocation2 + $0x10] sm:$0xf]
        %v748 = vld [vmem:[#allocation2 + $0x14] sm:$0x1]
        %v749 = vld [vmem:[#allocation2 + $0x18] sm:$0xf]
        %v750 = vld [vmem:[#allocation2 + $0x1c] sm:$0xf]
        %v751 = vld [vmem:[#allocation2 + $0x20] sm:$0x1]
        %v752 = vld [vmem:[#allocation2 + $0x24] sm:$0xf]
        %v753 = vld [vmem:[#allocation2 + $0x28] sm:$0xf]
        %v754 = vld [vmem:[#allocation2 + $0x2c] sm:$0x1]
        %v755 = vld [vmem:[#allocation2 + $0x30] sm:$0xf]
        %v756 = vld [vmem:[#allocation2 + $0x34] sm:$0xf]
        %v757 = vld [vmem:[#allocation2 + $0x38] sm:$0x1]
        %v758 = vld [vmem:[#allocation2 + $0x3c] sm:$0xf]
        %v759 = vld [vmem:[#allocation2 + $0x40] sm:$0xf]
        %v760 = vld [vmem:[#allocation2 + $0x44] sm:$0x1]
        %v761 = vld [vmem:[#allocation2 + $0x48] sm:$0xf]
        %v762 = vld [vmem:[#allocation2 + $0x4c] sm:$0xf]
        %v763 = vld [vmem:[#allocation2 + $0x50] sm:$0x1]
        %v764 = vld [vmem:[#allocation2 + $0x54] sm:$0xf]
        %v765 = vld [vmem:[#allocation2 + $0x58] sm:$0xf]
        %v766 = vld [vmem:[#allocation2 + $0x5c] sm:$0x1]
        %v767 = vld [vmem:[#allocation2 + $0x60] sm:$0xf]
        %v768 = vld [vmem:[#allocation2 + $0x64] sm:$0xf]
        %v769 = vld [vmem:[#allocation2 + $0x68] sm:$0x1]
        %v770 = vld [vmem:[#allocation2 + $0x6c] sm:$0xf]
        %v771 = vld [vmem:[#allocation2 + $0x70] sm:$0xf]
        %v772 = vld [vmem:[#allocation2 + $0x74] sm:$0x1]
        %v773 = vld [vmem:[#allocation2 + $0x78] sm:$0xf]
        %v774 = vld [vmem:[#allocation2 + $0x7c] sm:$0xf]
        %v775 = vld [vmem:[#allocation2 + $0x80] sm:$0x1]
        %v776 = vld [vmem:[#allocation2 + $0x84] sm:$0xf]
        %v777 = vld [vmem:[#allocation2 + $0x88] sm:$0xf]
        %v778 = vld [vmem:[#allocation2 + $0x8c] sm:$0x1]
        %v779 = vld [vmem:[#allocation2 + $0x90] sm:$0xf]
        %v780 = vld [vmem:[#allocation2 + $0x94] sm:$0xf]
        %v781 = vld [vmem:[#allocation2 + $0x98] sm:$0x1]
        %v782 = vld [vmem:[#allocation2 + $0x9c] sm:$0xf]
        %v783 = vld [vmem:[#allocation2 + $0xa0] sm:$0xf]
        %v784 = vld [vmem:[#allocation2 + $0xa4] sm:$0x1]
        %v785 = vld [vmem:[#allocation2 + $0xa8] sm:$0xf]
        %v786 = vld [vmem:[#allocation2 + $0xac] sm:$0xf]
        %v787 = vld [vmem:[#allocation2 + $0xb0] sm:$0x1]
        %v788 = vld [vmem:[#allocation2 + $0xb4] sm:$0xf]
        %v789 = vld [vmem:[#allocation2 + $0xb8] sm:$0xf]
        %v790 = vld [vmem:[#allocation2 + $0xbc] sm:$0x1]
        %v791 = vld [vmem:[#allocation2 + $0xc0] sm:$0xf]
        %v792 = vld [vmem:[#allocation2 + $0xc4] sm:$0xf]
        %v793 = vld [vmem:[#allocation2 + $0xc8] sm:$0x1]
        %v794 = vld [vmem:[#allocation2 + $0xcc] sm:$0xf]
        %v795 = vld [vmem:[#allocation2 + $0xd0] sm:$0xf]
        %v796 = vld [vmem:[#allocation2 + $0xd4] sm:$0x1]
        %v829 = vunpack.c.l.b16 %v743
        %v830 = vunpack.c.l.b16 %v744
        %v831 = vunpack.c.l.b16 %v746
        %v832 = vunpack.c.l.b16 %v747
        %v833 = vunpack.c.l.b16 %v749
        %v834 = vunpack.c.l.b16 %v750
        %v835 = vunpack.c.l.b16 %v752
        %v836 = vunpack.c.l.b16 %v753
        %v837 = vunpack.c.l.b16 %v755
        %v838 = vunpack.c.l.b16 %v756
        %v839 = vunpack.c.l.b16 %v758
        %v840 = vunpack.c.l.b16 %v759
        %v841 = vunpack.c.l.b16 %v761
        %v842 = vunpack.c.l.b16 %v762
        %v843 = vunpack.c.l.b16 %v764
        %v844 = vunpack.c.l.b16 %v765
        %v845 = vunpack.c.l.b16 %v767
        %v846 = vunpack.c.l.b16 %v768
        %v847 = vunpack.c.l.b16 %v770
        %v848 = vunpack.c.l.b16 %v771
        %v849 = vunpack.c.l.b16 %v773
        %v850 = vunpack.c.l.b16 %v774
        %v851 = vunpack.c.l.b16 %v776
        %v852 = vunpack.c.l.b16 %v777
        %v853 = vunpack.c.l.b16 %v779
        %v854 = vunpack.c.l.b16 %v780
        %v855 = vunpack.c.l.b16 %v782
        %v856 = vunpack.c.l.b16 %v783
        %v857 = vunpack.c.l.b16 %v785
        %v858 = vunpack.c.l.b16 %v786
        %v859 = vunpack.c.l.b16 %v788
        %v860 = vunpack.c.l.b16 %v789
        %v861 = vpack.c.b16 %v830, %v829
        %v862 = vpack.c.b16 %v832, %v831
        %v863 = vpack.c.b16 %v834, %v833
        %v864 = vpack.c.b16 %v836, %v835
        %v865 = vpack.c.b16 %v838, %v837
        %v866 = vpack.c.b16 %v840, %v839
        %v867 = vpack.c.b16 %v842, %v841
        %v868 = vpack.c.b16 %v844, %v843
        %v869 = vpack.c.b16 %v846, %v845
        %v870 = vpack.c.b16 %v848, %v847
        %v871 = vpack.c.b16 %v850, %v849
        %v872 = vpack.c.b16 %v852, %v851
        %v873 = vpack.c.b16 %v854, %v853
        %v874 = vpack.c.b16 %v856, %v855
        %v875 = vpack.c.b16 %v858, %v857
        %v876 = vpack.c.b16 %v860, %v859
        %v909 = vunpack.c.l.b16 %v745
        %v910 = vunpack.c.l.b16 %v748
        %v911 = vunpack.c.l.b16 %v751
        %v912 = vunpack.c.l.b16 %v754
        %v913 = vunpack.c.l.b16 %v757
        %v914 = vunpack.c.l.b16 %v760
        %v915 = vunpack.c.l.b16 %v763
        %v916 = vunpack.c.l.b16 %v766
        %v917 = vunpack.c.l.b16 %v769
        %v918 = vunpack.c.l.b16 %v772
        %v919 = vunpack.c.l.b16 %v775
        %v920 = vunpack.c.l.b16 %v778
        %v921 = vunpack.c.l.b16 %v781
        %v922 = vunpack.c.l.b16 %v784
        %v923 = vunpack.c.l.b16 %v787
        %v924 = vunpack.c.l.b16 %v790
        %v925 = vpack.c.b16 %v909, %v909
        %v926 = vpack.c.b16 %v910, %v910
        %v927 = vpack.c.b16 %v911, %v911
        %v928 = vpack.c.b16 %v912, %v912
        %v929 = vpack.c.b16 %v913, %v913
        %v930 = vpack.c.b16 %v914, %v914
        %v931 = vpack.c.b16 %v915, %v915
        %v932 = vpack.c.b16 %v916, %v916
        %v933 = vpack.c.b16 %v917, %v917
        %v934 = vpack.c.b16 %v918, %v918
        %v935 = vpack.c.b16 %v919, %v919
        %v936 = vpack.c.b16 %v920, %v920
        %v937 = vpack.c.b16 %v921, %v921
        %v938 = vpack.c.b16 %v922, %v922
        %v939 = vpack.c.b16 %v923, %v923
        %v940 = vpack.c.b16 %v924, %v924
        %vm941 = vsmask.f32 7424
        %v943 = vshrl.u32 %v861, 16
        %v945 = vshll.u32 %v861, 16
        %v947 = vrot.slane %v945, 1
        %v948 = vor.u32 %v943, %v947
        %v950 = vshll.u32 %v925, 16
        %v952 = vrot.slane %v950, 1
        %v953 = vsel %vm941, %v948, %v952
        %v955 = vshrl.u32 %v862, 16
        %v957 = vshll.u32 %v862, 16
        %v959 = vrot.slane %v957, 1
        %v960 = vor.u32 %v955, %v959
        %v962 = vshll.u32 %v926, 16
        %v964 = vrot.slane %v962, 1
        %v965 = vsel %vm941, %v960, %v964
        %v967 = vshrl.u32 %v863, 16
        %v969 = vshll.u32 %v863, 16
        %v971 = vrot.slane %v969, 1
        %v972 = vor.u32 %v967, %v971
        %v974 = vshll.u32 %v927, 16
        %v976 = vrot.slane %v974, 1
        %v977 = vsel %vm941, %v972, %v976
        %v979 = vshrl.u32 %v864, 16
        %v981 = vshll.u32 %v864, 16
        %v983 = vrot.slane %v981, 1
        %v984 = vor.u32 %v979, %v983
        %v986 = vshll.u32 %v928, 16
        %v988 = vrot.slane %v986, 1
        %v989 = vsel %vm941, %v984, %v988
        %v991 = vshrl.u32 %v865, 16
        %v993 = vshll.u32 %v865, 16
        %v995 = vrot.slane %v993, 1
        %v996 = vor.u32 %v991, %v995
        %v998 = vshll.u32 %v929, 16
        %v1000 = vrot.slane %v998, 1
        %v1001 = vsel %vm941, %v996, %v1000
        %v1003 = vshrl.u32 %v866, 16
        %v1005 = vshll.u32 %v866, 16
        %v1007 = vrot.slane %v1005, 1
        %v1008 = vor.u32 %v1003, %v1007
        %v1010 = vshll.u32 %v930, 16
        %v1012 = vrot.slane %v1010, 1
        %v1013 = vsel %vm941, %v1008, %v1012
        %v1015 = vshrl.u32 %v867, 16
        %v1017 = vshll.u32 %v867, 16
        %v1019 = vrot.slane %v1017, 1
        %v1020 = vor.u32 %v1015, %v1019
        %v1022 = vshll.u32 %v931, 16
        %v1024 = vrot.slane %v1022, 1
        %v1025 = vsel %vm941, %v1020, %v1024
        %v1027 = vshrl.u32 %v868, 16
        %v1029 = vshll.u32 %v868, 16
        %v1031 = vrot.slane %v1029, 1
        %v1032 = vor.u32 %v1027, %v1031
        %v1034 = vshll.u32 %v932, 16
        %v1036 = vrot.slane %v1034, 1
        %v1037 = vsel %vm941, %v1032, %v1036
        %v1039 = vshrl.u32 %v869, 16
        %v1041 = vshll.u32 %v869, 16
        %v1043 = vrot.slane %v1041, 1
        %v1044 = vor.u32 %v1039, %v1043
        %v1046 = vshll.u32 %v933, 16
        %v1048 = vrot.slane %v1046, 1
        %v1049 = vsel %vm941, %v1044, %v1048
        %v1051 = vshrl.u32 %v870, 16
        %v1053 = vshll.u32 %v870, 16
        %v1055 = vrot.slane %v1053, 1
        %v1056 = vor.u32 %v1051, %v1055
        %v1058 = vshll.u32 %v934, 16
        %v1060 = vrot.slane %v1058, 1
        %v1061 = vsel %vm941, %v1056, %v1060
        %v1063 = vshrl.u32 %v871, 16
        %v1065 = vshll.u32 %v871, 16
        %v1067 = vrot.slane %v1065, 1
        %v1068 = vor.u32 %v1063, %v1067
        %v1070 = vshll.u32 %v935, 16
        %v1072 = vrot.slane %v1070, 1
        %v1073 = vsel %vm941, %v1068, %v1072
        %v1075 = vshrl.u32 %v872, 16
        %v1077 = vshll.u32 %v872, 16
        %v1079 = vrot.slane %v1077, 1
        %v1080 = vor.u32 %v1075, %v1079
        %v1082 = vshll.u32 %v936, 16
        %v1084 = vrot.slane %v1082, 1
        %v1085 = vsel %vm941, %v1080, %v1084
        %v1087 = vshrl.u32 %v873, 16
        %v1089 = vshll.u32 %v873, 16
        %v1091 = vrot.slane %v1089, 1
        %v1092 = vor.u32 %v1087, %v1091
        %v1094 = vshll.u32 %v937, 16
        %v1096 = vrot.slane %v1094, 1
        %v1097 = vsel %vm941, %v1092, %v1096
        %v1099 = vshrl.u32 %v874, 16
        %v1101 = vshll.u32 %v874, 16
        %v1103 = vrot.slane %v1101, 1
        %v1104 = vor.u32 %v1099, %v1103
        %v1106 = vshll.u32 %v938, 16
        %v1108 = vrot.slane %v1106, 1
        %v1109 = vsel %vm941, %v1104, %v1108
        %v1111 = vshrl.u32 %v875, 16
        %v1113 = vshll.u32 %v875, 16
        %v1115 = vrot.slane %v1113, 1
        %v1116 = vor.u32 %v1111, %v1115
        %v1118 = vshll.u32 %v939, 16
        %v1120 = vrot.slane %v1118, 1
        %v1121 = vsel %vm941, %v1116, %v1120
        %v1123 = vshrl.u32 %v876, 16
        %v1125 = vshll.u32 %v876, 16
        %v1127 = vrot.slane %v1125, 1
        %v1128 = vor.u32 %v1123, %v1127
        %v1130 = vshll.u32 %v940, 16
        %v1132 = vrot.slane %v1130, 1
        %v1133 = vsel %vm941, %v1128, %v1132
        %vm1150 = vcmask 1046528
        %v1151 = vrot.slane %v861, 1
        %v1152 = vrot.slane %v925, 1
        %v1153 = vsel %vm1150, %v1151, %v1152
        %v1154 = vrot.slane %v862, 1
        %v1155 = vrot.slane %v926, 1
        %v1156 = vsel %vm1150, %v1154, %v1155
        %v1157 = vrot.slane %v863, 1
        %v1158 = vrot.slane %v927, 1
        %v1159 = vsel %vm1150, %v1157, %v1158
        %v1160 = vrot.slane %v864, 1
        %v1161 = vrot.slane %v928, 1
        %v1162 = vsel %vm1150, %v1160, %v1161
        %v1163 = vrot.slane %v865, 1
        %v1164 = vrot.slane %v929, 1
        %v1165 = vsel %vm1150, %v1163, %v1164
        %v1166 = vrot.slane %v866, 1
        %v1167 = vrot.slane %v930, 1
        %v1168 = vsel %vm1150, %v1166, %v1167
        %v1169 = vrot.slane %v867, 1
        %v1170 = vrot.slane %v931, 1
        %v1171 = vsel %vm1150, %v1169, %v1170
        %v1172 = vrot.slane %v868, 1
        %v1173 = vrot.slane %v932, 1
        %v1174 = vsel %vm1150, %v1172, %v1173
        %v1175 = vrot.slane %v869, 1
        %v1176 = vrot.slane %v933, 1
        %v1177 = vsel %vm1150, %v1175, %v1176
        %v1178 = vrot.slane %v870, 1
        %v1179 = vrot.slane %v934, 1
        %v1180 = vsel %vm1150, %v1178, %v1179
        %v1181 = vrot.slane %v871, 1
        %v1182 = vrot.slane %v935, 1
        %v1183 = vsel %vm1150, %v1181, %v1182
        %v1184 = vrot.slane %v872, 1
        %v1185 = vrot.slane %v936, 1
        %v1186 = vsel %vm1150, %v1184, %v1185
        %v1187 = vrot.slane %v873, 1
        %v1188 = vrot.slane %v937, 1
        %v1189 = vsel %vm1150, %v1187, %v1188
        %v1190 = vrot.slane %v874, 1
        %v1191 = vrot.slane %v938, 1
        %v1192 = vsel %vm1150, %v1190, %v1191
        %v1193 = vrot.slane %v875, 1
        %v1194 = vrot.slane %v939, 1
        %v1195 = vsel %vm1150, %v1193, %v1194
        %v1196 = vrot.slane %v876, 1
        %v1197 = vrot.slane %v940, 1
        %v1198 = vsel %vm1150, %v1196, %v1197
        %v1217 = vunpack.c.l.b16 %v791
        %v1218 = vunpack.c.l.b16 %v792
        %v1219 = vpack.c.b16 %v1218, %v1217
        %v1222 = vunpack.c.l.b16 %v793
        %v1223 = vpack.c.b16 %v1222, %v1222
        %v1225 = vshrl.u32 %v1219, 16
        %v1227 = vshll.u32 %v1219, 16
        %v1229 = vrot.slane %v1227, 1
        %v1230 = vor.u32 %v1225, %v1229
        %v1232 = vshll.u32 %v1223, 16
        %v1234 = vrot.slane %v1232, 1
        %v1235 = vsel %vm941, %v1230, %v1234
        %v1237 = vrot.slane %v1219, 1
        %v1238 = vrot.slane %v1223, 1
        %v1239 = vsel %vm1150, %v1237, %v1238
        %v1243 = vunpack.c.l.b16 %v794
        %v1244 = vunpack.c.l.b16 %v795
        %v1245 = vpack.c.b16 %v1244, %v1243
        %v1248 = vunpack.c.l.b16 %v796
        %v1249 = vpack.c.b16 %v1248, %v1248
        %v1251 = vshrl.u32 %v1245, 16
        %v1253 = vshll.u32 %v1245, 16
        %v1255 = vrot.slane %v1253, 1
        %v1256 = vor.u32 %v1251, %v1255
        %v1258 = vshll.u32 %v1249, 16
        %v1260 = vrot.slane %v1258, 1
        %v1261 = vsel %vm941, %v1256, %v1260
        %v1263 = vrot.slane %v1245, 1
        %v1264 = vrot.slane %v1249, 1
        %v1265 = vsel %vm1150, %v1263, %v1264
        %v1267 = vld [vmem:[#allocation6] sm:$0xf]
        %v1268 = vld [vmem:[#allocation6 + $0x4] sm:$0xf]
        %v1269 = vld [vmem:[#allocation6 + $0x8] sm:$0xf]
        %v1270 = vld [vmem:[#allocation6 + $0xc] sm:$0xf]
        %v1271 = vld [vmem:[#allocation6 + $0x10] sm:$0xf]
        %v1272 = vld [vmem:[#allocation6 + $0x14] sm:$0xf]
        %v1273 = vld [vmem:[#allocation6 + $0x18] sm:$0xf]
        %v1274 = vld [vmem:[#allocation6 + $0x1c] sm:$0xf]
        %v1275 = vld [vmem:[#allocation6 + $0x20] sm:$0xf]
        %v1276 = vld [vmem:[#allocation6 + $0x24] sm:$0xf]
        %v1277 = vld [vmem:[#allocation6 + $0x28] sm:$0xf]
        %v1278 = vld [vmem:[#allocation6 + $0x2c] sm:$0xf]
        %v1279 = vld [vmem:[#allocation6 + $0x30] sm:$0xf]
        %v1280 = vld [vmem:[#allocation6 + $0x34] sm:$0xf]
        %v1281 = vld [vmem:[#allocation6 + $0x38] sm:$0xf]
        %v1282 = vld [vmem:[#allocation6 + $0x3c] sm:$0xf]
        %v1283 = vld [vmem:[#allocation6 + $0x40] sm:$0xf]
        %v1284 = vld [vmem:[#allocation6 + $0x44] sm:$0xf]
        %v1285 = vld [vmem:[#allocation6 + $0x48] sm:$0xf]
        %v1286 = vld [vmem:[#allocation6 + $0x4c] sm:$0xf]
        %v1287 = vld [vmem:[#allocation6 + $0x50] sm:$0xf]
        %v1288 = vld [vmem:[#allocation6 + $0x54] sm:$0xf]
        %v1289 = vld [vmem:[#allocation6 + $0x58] sm:$0xf]
        %v1290 = vld [vmem:[#allocation6 + $0x5c] sm:$0xf]
        %v1291 = vld [vmem:[#allocation6 + $0x60] sm:$0xf]
        %v1292 = vld [vmem:[#allocation6 + $0x64] sm:$0xf]
        %v1293 = vld [vmem:[#allocation6 + $0x68] sm:$0xf]
        %v1294 = vld [vmem:[#allocation6 + $0x6c] sm:$0xf]
        %v1295 = vld [vmem:[#allocation6 + $0x70] sm:$0xf]
        %v1296 = vld [vmem:[#allocation6 + $0x74] sm:$0xf]
        %v1297 = vld [vmem:[#allocation6 + $0x78] sm:$0xf]
        %v1298 = vld [vmem:[#allocation6 + $0x7c] sm:$0xf]
        %v1299 = vld [vmem:[#allocation6 + $0x80] sm:$0xf]
        %v1300 = vld [vmem:[#allocation6 + $0x84] sm:$0xf]
        %v1301 = vld [vmem:[#allocation6 + $0x88] sm:$0xf]
        %v1302 = vld [vmem:[#allocation6 + $0x8c] sm:$0xf]
        %v1303 = vld [vmem:[#allocation6 + $0x90] sm:$0xf]
        %v1304 = vld [vmem:[#allocation6 + $0x94] sm:$0xf]
        %v1305 = vld [vmem:[#allocation6 + $0x98] sm:$0xf]
        %v1306 = vld [vmem:[#allocation6 + $0x9c] sm:$0xf]
        %v1307 = vld [vmem:[#allocation6 + $0xa0] sm:$0xf]
        %v1308 = vld [vmem:[#allocation6 + $0xa4] sm:$0xf]
        %v1309 = vld [vmem:[#allocation6 + $0xa8] sm:$0xf]
        %v1310 = vld [vmem:[#allocation6 + $0xac] sm:$0xf]
        %v1311 = vld [vmem:[#allocation6 + $0xb0] sm:$0xf]
        %v1312 = vld [vmem:[#allocation6 + $0xb4] sm:$0xf]
        %v1313 = vld [vmem:[#allocation6 + $0xb8] sm:$0xf]
        %v1314 = vld [vmem:[#allocation6 + $0xbc] sm:$0xf]
        %v1315 = vld [vmem:[#allocation6 + $0xc0] sm:$0xf]
        %v1316 = vld [vmem:[#allocation6 + $0xc4] sm:$0xf]
        %v1317 = vld [vmem:[#allocation6 + $0xc8] sm:$0xf]
        %v1318 = vld [vmem:[#allocation6 + $0xcc] sm:$0xf]
        %v1319 = vld [vmem:[#allocation6 + $0xd0] sm:$0xf]
        %v1320 = vld [vmem:[#allocation6 + $0xd4] sm:$0xf]
        %v1321 = vld [vmem:[#allocation6 + $0xd8] sm:$0xf]
        %v1322 = vld [vmem:[#allocation6 + $0xdc] sm:$0xf]
        %v1323 = vld [vmem:[#allocation6 + $0xe0] sm:$0xf]
        %v1324 = vld [vmem:[#allocation6 + $0xe4] sm:$0xf]
        %v1325 = vld [vmem:[#allocation6 + $0xe8] sm:$0xf]
        %v1326 = vld [vmem:[#allocation6 + $0xec] sm:$0xf]
        %v1327 = vld [vmem:[#allocation6 + $0xf0] sm:$0xf]
        %v1328 = vld [vmem:[#allocation6 + $0xf4] sm:$0xf]
        %v1329 = vld [vmem:[#allocation6 + $0xf8] sm:$0xf]
        %v1330 = vld [vmem:[#allocation6 + $0xfc] sm:$0xf]
        %v1331 = vld [vmem:[#allocation6 + $0x100] sm:$0xf]
        %v1332 = vld [vmem:[#allocation6 + $0x104] sm:$0xf]
        %v1333 = vld [vmem:[#allocation6 + $0x108] sm:$0xf]
        %v1334 = vld [vmem:[#allocation6 + $0x10c] sm:$0xf]
        %v1335 = vld [vmem:[#allocation6 + $0x110] sm:$0xf]
        %v1336 = vld [vmem:[#allocation6 + $0x114] sm:$0xf]
        %v1337 = vld [vmem:[#allocation6 + $0x118] sm:$0xf]
        %v1338 = vld [vmem:[#allocation6 + $0x11c] sm:$0xf]
        %v1339 = vld [vmem:[#allocation6 + $0x120] sm:$0xf]
        %v1340 = vld [vmem:[#allocation6 + $0x124] sm:$0xf]
        %v1341 = vld [vmem:[#allocation6 + $0x128] sm:$0xf]
        %v1342 = vld [vmem:[#allocation6 + $0x12c] sm:$0xf]
        %v1343 = vld [vmem:[#allocation6 + $0x130] sm:$0xf]
        %v1344 = vld [vmem:[#allocation6 + $0x134] sm:$0xf]
        %v1345 = vld [vmem:[#allocation6 + $0x138] sm:$0xf]
        %v1346 = vld [vmem:[#allocation6 + $0x13c] sm:$0xf]
        %v1347 = vld [vmem:[#allocation6 + $0x140] sm:$0xf]
        %v1348 = vld [vmem:[#allocation6 + $0x144] sm:$0xf]
        %v1349 = vld [vmem:[#allocation6 + $0x148] sm:$0xf]
        %v1350 = vld [vmem:[#allocation6 + $0x14c] sm:$0xf]
        %v1351 = vld [vmem:[#allocation6 + $0x150] sm:$0xf]
        %v1352 = vld [vmem:[#allocation6 + $0x154] sm:$0xf]
        %v1353 = vld [vmem:[#allocation6 + $0x158] sm:$0xf]
        %v1354 = vld [vmem:[#allocation6 + $0x15c] sm:$0xf]
        %v1355 = vld [vmem:[#allocation6 + $0x160] sm:$0xf]
        %v1356 = vld [vmem:[#allocation6 + $0x164] sm:$0xf]
        %v1357 = vld [vmem:[#allocation6 + $0x168] sm:$0xf]
        %v1358 = vld [vmem:[#allocation6 + $0x16c] sm:$0xf]
        %v1359 = vld [vmem:[#allocation6 + $0x170] sm:$0xf]
        %v1360 = vld [vmem:[#allocation6 + $0x174] sm:$0xf]
        %v1361 = vld [vmem:[#allocation6 + $0x178] sm:$0xf]
        %v1362 = vld [vmem:[#allocation6 + $0x17c] sm:$0xf]
        %v1363 = vld [vmem:[#allocation6 + $0x180] sm:$0xf]
        %v1364 = vld [vmem:[#allocation6 + $0x184] sm:$0xf]
        %v1365 = vld [vmem:[#allocation6 + $0x188] sm:$0xf]
        %v1366 = vld [vmem:[#allocation6 + $0x18c] sm:$0xf]
        %v1367 = vld [vmem:[#allocation6 + $0x190] sm:$0xf]
        %v1368 = vld [vmem:[#allocation6 + $0x194] sm:$0xf]
        %v1369 = vld [vmem:[#allocation6 + $0x198] sm:$0xf]
        %v1370 = vld [vmem:[#allocation6 + $0x19c] sm:$0xf]
        %v1371 = vld [vmem:[#allocation6 + $0x1a0] sm:$0xf]
        %v1372 = vld [vmem:[#allocation6 + $0x1a4] sm:$0xf]
        %v1373 = vld [vmem:[#allocation6 + $0x1a8] sm:$0xf]
        %v1374 = vld [vmem:[#allocation6 + $0x1ac] sm:$0xf]
        %v1375 = vld [vmem:[#allocation6 + $0x1b0] sm:$0xf]
        %v1376 = vld [vmem:[#allocation6 + $0x1b4] sm:$0xf]
        %v1377 = vld [vmem:[#allocation6 + $0x1b8] sm:$0xf]
        %v1378 = vld [vmem:[#allocation6 + $0x1bc] sm:$0xf]
        %v1379 = vld [vmem:[#allocation6 + $0x1c0] sm:$0xf]
        %v1380 = vld [vmem:[#allocation6 + $0x1c4] sm:$0xf]
        %v1381 = vld [vmem:[#allocation6 + $0x1c8] sm:$0xf]
        %v1382 = vld [vmem:[#allocation6 + $0x1cc] sm:$0xf]
        %v1383 = vld [vmem:[#allocation6 + $0x1d0] sm:$0xf]
        %v1384 = vld [vmem:[#allocation6 + $0x1d4] sm:$0xf]
        %v1385 = vld [vmem:[#allocation6 + $0x1d8] sm:$0xf]
        %v1386 = vld [vmem:[#allocation6 + $0x1dc] sm:$0xf]
        %v1387 = vld [vmem:[#allocation6 + $0x1e0] sm:$0xf]
        %v1388 = vld [vmem:[#allocation6 + $0x1e4] sm:$0xf]
        %v1389 = vld [vmem:[#allocation6 + $0x1e8] sm:$0xf]
        %v1390 = vld [vmem:[#allocation6 + $0x1ec] sm:$0xf]
        %v1391 = vld [vmem:[#allocation6 + $0x1f0] sm:$0xf]
        %v1392 = vld [vmem:[#allocation6 + $0x1f4] sm:$0xf]
        %v1393 = vld [vmem:[#allocation6 + $0x1f8] sm:$0xf]
        %v1394 = vld [vmem:[#allocation6 + $0x1fc] sm:$0xf]
        %v1395 = vld [vmem:[#allocation6 + $0x200] sm:$0xf]
        %v1396 = vld [vmem:[#allocation6 + $0x204] sm:$0xf]
        %v1397 = vld [vmem:[#allocation6 + $0x208] sm:$0xf]
        %v1398 = vld [vmem:[#allocation6 + $0x20c] sm:$0xf]
        %v1399 = vld [vmem:[#allocation6 + $0x210] sm:$0xf]
        %v1400 = vld [vmem:[#allocation6 + $0x214] sm:$0xf]
        %v1401 = vld [vmem:[#allocation6 + $0x218] sm:$0xf]
        %v1402 = vld [vmem:[#allocation6 + $0x21c] sm:$0xf]
        %v1403 = vld [vmem:[#allocation6 + $0x220] sm:$0xf]
        %v1404 = vld [vmem:[#allocation6 + $0x224] sm:$0xf]
        %v1405 = vld [vmem:[#allocation6 + $0x228] sm:$0xf]
        %v1406 = vld [vmem:[#allocation6 + $0x22c] sm:$0xf]
        %v1407 = vld [vmem:[#allocation6 + $0x230] sm:$0xf]
        %v1408 = vld [vmem:[#allocation6 + $0x234] sm:$0xf]
        %v1409 = vld [vmem:[#allocation6 + $0x238] sm:$0xf]
        %v1410 = vld [vmem:[#allocation6 + $0x23c] sm:$0xf]
        %v1555 = vunpack.c.l.b16 %v1267
        %v1556 = vunpack.c.l.b16 %v1268
        %v1557 = vunpack.c.l.b16 %v1269
        %v1558 = vunpack.c.l.b16 %v1270
        %v1559 = vunpack.c.l.b16 %v1271
        %v1560 = vunpack.c.l.b16 %v1272
        %v1561 = vunpack.c.l.b16 %v1273
        %v1562 = vunpack.c.l.b16 %v1274
        %v1563 = vunpack.c.l.b16 %v1275
        %v1564 = vunpack.c.l.b16 %v1276
        %v1565 = vunpack.c.l.b16 %v1277
        %v1566 = vunpack.c.l.b16 %v1278
        %v1567 = vunpack.c.l.b16 %v1279
        %v1568 = vunpack.c.l.b16 %v1280
        %v1569 = vunpack.c.l.b16 %v1281
        %v1570 = vunpack.c.l.b16 %v1282
        %v1571 = vunpack.c.l.b16 %v1283
        %v1572 = vunpack.c.l.b16 %v1284
        %v1573 = vunpack.c.l.b16 %v1285
        %v1574 = vunpack.c.l.b16 %v1286
        %v1575 = vunpack.c.l.b16 %v1287
        %v1576 = vunpack.c.l.b16 %v1288
        %v1577 = vunpack.c.l.b16 %v1289
        %v1578 = vunpack.c.l.b16 %v1290
        %v1579 = vunpack.c.l.b16 %v1291
        %v1580 = vunpack.c.l.b16 %v1292
        %v1581 = vunpack.c.l.b16 %v1293
        %v1582 = vunpack.c.l.b16 %v1294
        %v1583 = vunpack.c.l.b16 %v1295
        %v1584 = vunpack.c.l.b16 %v1296
        %v1585 = vunpack.c.l.b16 %v1297
        %v1586 = vunpack.c.l.b16 %v1298
        %v1587 = vunpack.c.l.b16 %v1299
        %v1588 = vunpack.c.l.b16 %v1300
        %v1589 = vunpack.c.l.b16 %v1301
        %v1590 = vunpack.c.l.b16 %v1302
        %v1591 = vunpack.c.l.b16 %v1303
        %v1592 = vunpack.c.l.b16 %v1304
        %v1593 = vunpack.c.l.b16 %v1305
        %v1594 = vunpack.c.l.b16 %v1306
        %v1595 = vunpack.c.l.b16 %v1307
        %v1596 = vunpack.c.l.b16 %v1308
        %v1597 = vunpack.c.l.b16 %v1309
        %v1598 = vunpack.c.l.b16 %v1310
        %v1599 = vunpack.c.l.b16 %v1311
        %v1600 = vunpack.c.l.b16 %v1312
        %v1601 = vunpack.c.l.b16 %v1313
        %v1602 = vunpack.c.l.b16 %v1314
        %v1603 = vunpack.c.l.b16 %v1315
        %v1604 = vunpack.c.l.b16 %v1316
        %v1605 = vunpack.c.l.b16 %v1317
        %v1606 = vunpack.c.l.b16 %v1318
        %v1607 = vunpack.c.l.b16 %v1319
        %v1608 = vunpack.c.l.b16 %v1320
        %v1609 = vunpack.c.l.b16 %v1321
        %v1610 = vunpack.c.l.b16 %v1322
        %v1611 = vunpack.c.l.b16 %v1323
        %v1612 = vunpack.c.l.b16 %v1324
        %v1613 = vunpack.c.l.b16 %v1325
        %v1614 = vunpack.c.l.b16 %v1326
        %v1615 = vunpack.c.l.b16 %v1327
        %v1616 = vunpack.c.l.b16 %v1328
        %v1617 = vunpack.c.l.b16 %v1329
        %v1618 = vunpack.c.l.b16 %v1330
        %v1619 = vunpack.c.l.b16 %v1331
        %v1620 = vunpack.c.l.b16 %v1332
        %v1621 = vunpack.c.l.b16 %v1333
        %v1622 = vunpack.c.l.b16 %v1334
        %v1623 = vunpack.c.l.b16 %v1335
        %v1624 = vunpack.c.l.b16 %v1336
        %v1625 = vunpack.c.l.b16 %v1337
        %v1626 = vunpack.c.l.b16 %v1338
        %v1627 = vunpack.c.l.b16 %v1339
        %v1628 = vunpack.c.l.b16 %v1340
        %v1629 = vunpack.c.l.b16 %v1341
        %v1630 = vunpack.c.l.b16 %v1342
        %v1631 = vunpack.c.l.b16 %v1343
        %v1632 = vunpack.c.l.b16 %v1344
        %v1633 = vunpack.c.l.b16 %v1345
        %v1634 = vunpack.c.l.b16 %v1346
        %v1635 = vunpack.c.l.b16 %v1347
        %v1636 = vunpack.c.l.b16 %v1348
        %v1637 = vunpack.c.l.b16 %v1349
        %v1638 = vunpack.c.l.b16 %v1350
        %v1639 = vunpack.c.l.b16 %v1351
        %v1640 = vunpack.c.l.b16 %v1352
        %v1641 = vunpack.c.l.b16 %v1353
        %v1642 = vunpack.c.l.b16 %v1354
        %v1643 = vunpack.c.l.b16 %v1355
        %v1644 = vunpack.c.l.b16 %v1356
        %v1645 = vunpack.c.l.b16 %v1357
        %v1646 = vunpack.c.l.b16 %v1358
        %v1647 = vunpack.c.l.b16 %v1359
        %v1648 = vunpack.c.l.b16 %v1360
        %v1649 = vunpack.c.l.b16 %v1361
        %v1650 = vunpack.c.l.b16 %v1362
        %v1651 = vunpack.c.l.b16 %v1363
        %v1652 = vunpack.c.l.b16 %v1364
        %v1653 = vunpack.c.l.b16 %v1365
        %v1654 = vunpack.c.l.b16 %v1366
        %v1655 = vunpack.c.l.b16 %v1367
        %v1656 = vunpack.c.l.b16 %v1368
        %v1657 = vunpack.c.l.b16 %v1369
        %v1658 = vunpack.c.l.b16 %v1370
        %v1659 = vunpack.c.l.b16 %v1371
        %v1660 = vunpack.c.l.b16 %v1372
        %v1661 = vunpack.c.l.b16 %v1373
        %v1662 = vunpack.c.l.b16 %v1374
        %v1663 = vunpack.c.l.b16 %v1375
        %v1664 = vunpack.c.l.b16 %v1376
        %v1665 = vunpack.c.l.b16 %v1377
        %v1666 = vunpack.c.l.b16 %v1378
        %v1667 = vunpack.c.l.b16 %v1379
        %v1668 = vunpack.c.l.b16 %v1380
        %v1669 = vunpack.c.l.b16 %v1381
        %v1670 = vunpack.c.l.b16 %v1382
        %v1671 = vunpack.c.l.b16 %v1383
        %v1672 = vunpack.c.l.b16 %v1384
        %v1673 = vunpack.c.l.b16 %v1385
        %v1674 = vunpack.c.l.b16 %v1386
        %v1675 = vunpack.c.l.b16 %v1387
        %v1676 = vunpack.c.l.b16 %v1388
        %v1677 = vunpack.c.l.b16 %v1389
        %v1678 = vunpack.c.l.b16 %v1390
        %v1679 = vunpack.c.l.b16 %v1391
        %v1680 = vunpack.c.l.b16 %v1392
        %v1681 = vunpack.c.l.b16 %v1393
        %v1682 = vunpack.c.l.b16 %v1394
        %v1683 = vunpack.c.l.b16 %v1395
        %v1684 = vunpack.c.l.b16 %v1396
        %v1685 = vunpack.c.l.b16 %v1397
        %v1686 = vunpack.c.l.b16 %v1398
        %v1687 = vunpack.c.l.b16 %v1399
        %v1688 = vunpack.c.l.b16 %v1400
        %v1689 = vunpack.c.l.b16 %v1401
        %v1690 = vunpack.c.l.b16 %v1402
        %v1691 = vunpack.c.l.b16 %v1403
        %v1692 = vunpack.c.l.b16 %v1404
        %v1693 = vunpack.c.l.b16 %v1405
        %v1694 = vunpack.c.l.b16 %v1406
        %v1695 = vunpack.c.l.b16 %v1407
        %v1696 = vunpack.c.l.b16 %v1408
        %v1697 = vunpack.c.l.b16 %v1409
        %v1698 = vunpack.c.l.b16 %v1410
        %v1699 = vpack.c.b16 %v1556, %v1555
        %v1700 = vpack.c.b16 %v1558, %v1557
        %v1701 = vpack.c.b16 %v1560, %v1559
        %v1702 = vpack.c.b16 %v1562, %v1561
        %v1703 = vpack.c.b16 %v1564, %v1563
        %v1704 = vpack.c.b16 %v1566, %v1565
        %v1705 = vpack.c.b16 %v1568, %v1567
        %v1706 = vpack.c.b16 %v1570, %v1569
        %v1707 = vpack.c.b16 %v1572, %v1571
        %v1708 = vpack.c.b16 %v1574, %v1573
        %v1709 = vpack.c.b16 %v1576, %v1575
        %v1710 = vpack.c.b16 %v1578, %v1577
        %v1711 = vpack.c.b16 %v1580, %v1579
        %v1712 = vpack.c.b16 %v1582, %v1581
        %v1713 = vpack.c.b16 %v1584, %v1583
        %v1714 = vpack.c.b16 %v1586, %v1585
        %v1715 = vpack.c.b16 %v1588, %v1587
        %v1716 = vpack.c.b16 %v1590, %v1589
        %v1717 = vpack.c.b16 %v1592, %v1591
        %v1718 = vpack.c.b16 %v1594, %v1593
        %v1719 = vpack.c.b16 %v1596, %v1595
        %v1720 = vpack.c.b16 %v1598, %v1597
        %v1721 = vpack.c.b16 %v1600, %v1599
        %v1722 = vpack.c.b16 %v1602, %v1601
        %v1723 = vpack.c.b16 %v1604, %v1603
        %v1724 = vpack.c.b16 %v1606, %v1605
        %v1725 = vpack.c.b16 %v1608, %v1607
        %v1726 = vpack.c.b16 %v1610, %v1609
        %v1727 = vpack.c.b16 %v1612, %v1611
        %v1728 = vpack.c.b16 %v1614, %v1613
        %v1729 = vpack.c.b16 %v1616, %v1615
        %v1730 = vpack.c.b16 %v1618, %v1617
        %v1731 = vpack.c.b16 %v1620, %v1619
        %v1732 = vpack.c.b16 %v1622, %v1621
        %v1733 = vpack.c.b16 %v1624, %v1623
        %v1734 = vpack.c.b16 %v1626, %v1625
        %v1735 = vpack.c.b16 %v1628, %v1627
        %v1736 = vpack.c.b16 %v1630, %v1629
        %v1737 = vpack.c.b16 %v1632, %v1631
        %v1738 = vpack.c.b16 %v1634, %v1633
        %v1739 = vpack.c.b16 %v1636, %v1635
        %v1740 = vpack.c.b16 %v1638, %v1637
        %v1741 = vpack.c.b16 %v1640, %v1639
        %v1742 = vpack.c.b16 %v1642, %v1641
        %v1743 = vpack.c.b16 %v1644, %v1643
        %v1744 = vpack.c.b16 %v1646, %v1645
        %v1745 = vpack.c.b16 %v1648, %v1647
        %v1746 = vpack.c.b16 %v1650, %v1649
        %v1747 = vpack.c.b16 %v1652, %v1651
        %v1748 = vpack.c.b16 %v1654, %v1653
        %v1749 = vpack.c.b16 %v1656, %v1655
        %v1750 = vpack.c.b16 %v1658, %v1657
        %v1751 = vpack.c.b16 %v1660, %v1659
        %v1752 = vpack.c.b16 %v1662, %v1661
        %v1753 = vpack.c.b16 %v1664, %v1663
        %v1754 = vpack.c.b16 %v1666, %v1665
        %v1755 = vpack.c.b16 %v1668, %v1667
        %v1756 = vpack.c.b16 %v1670, %v1669
        %v1757 = vpack.c.b16 %v1672, %v1671
        %v1758 = vpack.c.b16 %v1674, %v1673
        %v1759 = vpack.c.b16 %v1676, %v1675
        %v1760 = vpack.c.b16 %v1678, %v1677
        %v1761 = vpack.c.b16 %v1680, %v1679
        %v1762 = vpack.c.b16 %v1682, %v1681
        %v1763 = vpack.c.b16 %v1684, %v1683
        %v1764 = vpack.c.b16 %v1686, %v1685
        %v1765 = vpack.c.b16 %v1688, %v1687
        %v1766 = vpack.c.b16 %v1690, %v1689
        %v1767 = vpack.c.b16 %v1692, %v1691
        %v1768 = vpack.c.b16 %v1694, %v1693
        %v1769 = vpack.c.b16 %v1696, %v1695
        %v1770 = vpack.c.b16 %v1698, %v1697
        %1843 = vmatprep.subr.bf16.mxu0 0
        %1844 = vmatpush1.bf16.msra.mxu0 %v1699
        %1845 = vmatprep.subr.bf16.mxu0 0
        %1846 = vmatpush1.bf16.msra.mxu0 %v1700
        %1847 = vmatprep.subr.bf16.mxu0 0
        %1848 = vmatpush1.bf16.msra.mxu0 %v1701
        %1849 = vmatprep.subr.bf16.mxu0 0
        %1850 = vmatpush1.bf16.msra.mxu0 %v1702
        %1851 = vmatprep.subr.bf16.mxu0 0
        %1852 = vmatpush1.bf16.msra.mxu0 %v1703
        %1853 = vmatprep.subr.bf16.mxu0 0
        %1854 = vmatpush1.bf16.msra.mxu0 %v1704
        %1855 = vmatprep.subr.bf16.mxu0 0
        %1856 = vmatpush1.bf16.msra.mxu0 %v1705
        %1857 = vmatprep.subr.bf16.mxu0 0
        %1858 = vmatpush1.bf16.msra.mxu0 %v1706
        %1859 = vmatprep.subr.bf16.mxu0 0
        %1860 = vmatpush1.bf16.msra.mxu0 %v1707
        %1861 = vmatprep.subr.bf16.mxu0 0
        %1862 = vmatpush1.bf16.msra.mxu0 %v1708
        %1863 = vmatprep.subr.bf16.mxu0 0
        %1864 = vmatpush1.bf16.msra.mxu0 %v1709
        %1865 = vmatprep.subr.bf16.mxu0 0
        %1866 = vmatpush1.bf16.msra.mxu0 %v1710
        %1867 = vmatprep.subr.bf16.mxu0 0
        %1868 = vmatpush1.bf16.msra.mxu0 %v1711
        %1869 = vmatprep.subr.bf16.mxu0 0
        %1870 = vmatpush1.bf16.msra.mxu0 %v1712
        %1871 = vmatprep.subr.bf16.mxu0 0
        %1872 = vmatpush1.bf16.msra.mxu0 %v1713
        %1873 = vmatprep.subr.bf16.mxu0 0
        %1874 = vmatpush1.bf16.msra.mxu0 %v1714
        %1875 = vmatprep.mubr.bf16.mxu0 %v953
        %1876 = vmatmul.mubr.bf16.gmra.mrb[0].mxu0 %v861
        %v1877 = vpop.f32.mrb[0].mxu0
        %v1878 = vadd.f32 0.0, %v1877
        %v1879 = vpop.f32.mrb[0].mxu0
        %v1880 = vpop.f32.mrb[0].mxu0
        %v1881 = vadd.f32 0.0, %v1880
        %v1882 = vpop.f32.mrb[0].mxu0
        %1883 = vmatprep.mubr.bf16.mxu0 %v965
        %1884 = vmatmul.mubr.bf16.gmra.mrb[0].mxu0 %v862
        %v1885 = vpop.f32.mrb[0].mxu0
        %v1886 = vadd.f32 0.0, %v1885
        %v1887 = vpop.f32.mrb[0].mxu0
        %v1888 = vpop.f32.mrb[0].mxu0
        %v1889 = vadd.f32 0.0, %v1888
        %v1890 = vpop.f32.mrb[0].mxu0
        %1891 = vmatprep.mubr.bf16.mxu0 %v977
        %1892 = vmatmul.mubr.bf16.gmra.mrb[0].mxu0 %v863
        %v1893 = vpop.f32.mrb[0].mxu0
        %v1894 = vadd.f32 0.0, %v1893
        %v1895 = vpop.f32.mrb[0].mxu0
        %v1896 = vpop.f32.mrb[0].mxu0
        %v1897 = vadd.f32 0.0, %v1896
        %v1898 = vpop.f32.mrb[0].mxu0
        %1899 = vmatprep.mubr.bf16.mxu0 %v989
        %1900 = vmatmul.mubr.bf16.gmra.mrb[0].mxu0 %v864
        %v1901 = vpop.f32.mrb[0].mxu0
        %v1902 = vadd.f32 0.0, %v1901
        %v1903 = vpop.f32.mrb[0].mxu0
        %v1904 = vpop.f32.mrb[0].mxu0
        %v1905 = vadd.f32 0.0, %v1904
        %v1906 = vpop.f32.mrb[0].mxu0
        %1907 = vmatprep.mubr.bf16.mxu0 %v1001
        %1908 = vmatmul.mubr.bf16.gmra.mrb[0].mxu0 %v865
        %v1909 = vpop.f32.mrb[0].mxu0
        %v1910 = vadd.f32 0.0, %v1909
        %v1911 = vpop.f32.mrb[0].mxu0
        %v1912 = vpop.f32.mrb[0].mxu0
        %v1913 = vadd.f32 0.0, %v1912
        %v1914 = vpop.f32.mrb[0].mxu0
        %1915 = vmatprep.mubr.bf16.mxu0 %v1013
        %1916 = vmatmul.mubr.bf16.gmra.mrb[0].mxu0 %v866
        %v1917 = vpop.f32.mrb[0].mxu0
        %v1918 = vadd.f32 0.0, %v1917
        %v1919 = vpop.f32.mrb[0].mxu0
        %v1920 = vpop.f32.mrb[0].mxu0
        %v1921 = vadd.f32 0.0, %v1920
        %v1922 = vpop.f32.mrb[0].mxu0
        %1923 = vmatprep.mubr.bf16.mxu0 %v1025
        %1924 = vmatmul.mubr.bf16.gmra.mrb[0].mxu0 %v867
        %v1925 = vpop.f32.mrb[0].mxu0
        %v1926 = vadd.f32 0.0, %v1925
        %v1927 = vpop.f32.mrb[0].mxu0
        %v1928 = vpop.f32.mrb[0].mxu0
        %v1929 = vadd.f32 0.0, %v1928
        %v1930 = vpop.f32.mrb[0].mxu0
        %1931 = vmatprep.mubr.bf16.mxu0 %v1037
        %1932 = vmatmul.mubr.bf16.gmra.mrb[0].mxu0 %v868
        %v1933 = vpop.f32.mrb[0].mxu0
        %v1934 = vadd.f32 0.0, %v1933
        %v1935 = vpop.f32.mrb[0].mxu0
        %v1936 = vpop.f32.mrb[0].mxu0
        %v1937 = vadd.f32 0.0, %v1936
        %v1938 = vpop.f32.mrb[0].mxu0
        %1939 = vmatprep.mubr.bf16.mxu0 %v1049
        %1940 = vmatmul.mubr.bf16.gmra.mrb[0].mxu0 %v869
        %v1941 = vpop.f32.mrb[0].mxu0
        %v1942 = vadd.f32 0.0, %v1941
        %v1943 = vpop.f32.mrb[0].mxu0
        %v1944 = vpop.f32.mrb[0].mxu0
        %v1945 = vadd.f32 0.0, %v1944
        %v1946 = vpop.f32.mrb[0].mxu0
        %1947 = vmatprep.mubr.bf16.mxu0 %v1061
        %1948 = vmatmul.mubr.bf16.gmra.mrb[0].mxu0 %v870
        %v1949 = vpop.f32.mrb[0].mxu0
        %v1950 = vadd.f32 0.0, %v1949
        %v1951 = vpop.f32.mrb[0].mxu0
        %v1952 = vpop.f32.mrb[0].mxu0
        %v1953 = vadd.f32 0.0, %v1952
        %v1954 = vpop.f32.mrb[0].mxu0
        %1955 = vmatprep.mubr.bf16.mxu0 %v1073
        %1956 = vmatmul.mubr.bf16.gmra.mrb[0].mxu0 %v871
        %v1957 = vpop.f32.mrb[0].mxu0
        %v1958 = vadd.f32 0.0, %v1957
        %v1959 = vpop.f32.mrb[0].mxu0
        %v1960 = vpop.f32.mrb[0].mxu0
        %v1961 = vadd.f32 0.0, %v1960
        %v1962 = vpop.f32.mrb[0].mxu0
        %1963 = vmatprep.mubr.bf16.mxu0 %v1085
        %1964 = vmatmul.mubr.bf16.gmra.mrb[0].mxu0 %v872
        %v1965 = vpop.f32.mrb[0].mxu0
        %v1966 = vadd.f32 0.0, %v1965
        %v1967 = vpop.f32.mrb[0].mxu0
        %v1968 = vpop.f32.mrb[0].mxu0
        %v1969 = vadd.f32 0.0, %v1968
        %v1970 = vpop.f32.mrb[0].mxu0
        %1971 = vmatprep.mubr.bf16.mxu0 %v1097
        %1972 = vmatmul.mubr.bf16.gmra.mrb[0].mxu0 %v873
        %v1973 = vpop.f32.mrb[0].mxu0
        %v1974 = vadd.f32 0.0, %v1973
        %v1975 = vpop.f32.mrb[0].mxu0
        %v1976 = vpop.f32.mrb[0].mxu0
        %v1977 = vadd.f32 0.0, %v1976
        %v1978 = vpop.f32.mrb[0].mxu0
        %1979 = vmatprep.mubr.bf16.mxu0 %v1109
        %1980 = vmatmul.mubr.bf16.gmra.mrb[0].mxu0 %v874
        %v1981 = vpop.f32.mrb[0].mxu0
        %v1982 = vadd.f32 0.0, %v1981
        %v1983 = vpop.f32.mrb[0].mxu0
        %v1984 = vpop.f32.mrb[0].mxu0
        %v1985 = vadd.f32 0.0, %v1984
        %v1986 = vpop.f32.mrb[0].mxu0
        %1987 = vmatprep.mubr.bf16.mxu0 %v1121
        %1988 = vmatmul.mubr.bf16.gmra.mrb[0].mxu0 %v875
        %v1989 = vpop.f32.mrb[0].mxu0
        %v1990 = vadd.f32 0.0, %v1989
        %v1991 = vpop.f32.mrb[0].mxu0
        %v1992 = vpop.f32.mrb[0].mxu0
        %v1993 = vadd.f32 0.0, %v1992
        %v1994 = vpop.f32.mrb[0].mxu0
        %1995 = vmatprep.mubr.bf16.mxu0 %v1133
        %1996 = vmatmul.mubr.bf16.gmra.mrb[0].mxu0 %v876
        %v1997 = vpop.f32.mrb[0].mxu0
        %v1998 = vadd.f32 0.0, %v1997
        %v1999 = vpop.f32.mrb[0].mxu0
        %v2000 = vpop.f32.mrb[0].mxu0
        %v2001 = vadd.f32 0.0, %v2000
        %v2002 = vpop.f32.mrb[0].mxu0
        %2003 = vdwg.mxu0
        %2004 = vmatprep.subr.bf16.mxu0 0
        %2005 = vmatpush1.bf16.msra.mxu0 %v1715
        %2006 = vmatprep.subr.bf16.mxu0 0
        %2007 = vmatpush1.bf16.msra.mxu0 %v1716
        %2008 = vmatprep.subr.bf16.mxu0 0
        %2009 = vmatpush1.bf16.msra.mxu0 %v1717
        %2010 = vmatprep.subr.bf16.mxu0 0
        %2011 = vmatpush1.bf16.msra.mxu0 %v1718
        %2012 = vmatprep.subr.bf16.mxu0 0
        %2013 = vmatpush1.bf16.msra.mxu0 %v1719
        %2014 = vmatprep.subr.bf16.mxu0 0
        %2015 = vmatpush1.bf16.msra.mxu0 %v1720
        %2016 = vmatprep.subr.bf16.mxu0 0
        %2017 = vmatpush1.bf16.msra.mxu0 %v1721
        %2018 = vmatprep.subr.bf16.mxu0 0
        %2019 = vmatpush1.bf16.msra.mxu0 %v1722
        %2020 = vmatprep.subr.bf16.mxu0 0
        %2021 = vmatpush1.bf16.msra.mxu0 %v1723
        %2022 = vmatprep.subr.bf16.mxu0 0
        %2023 = vmatpush1.bf16.msra.mxu0 %v1724
        %2024 = vmatprep.subr.bf16.mxu0 0
        %2025 = vmatpush1.bf16.msra.mxu0 %v1725
        %2026 = vmatprep.subr.bf16.mxu0 0
        %2027 = vmatpush1.bf16.msra.mxu0 %v1726
        %2028 = vmatprep.subr.bf16.mxu0 0
        %2029 = vmatpush1.bf16.msra.mxu0 %v1727
        %2030 = vmatprep.subr.bf16.mxu0 0
        %2031 = vmatpush1.bf16.msra.mxu0 %v1728
        %2032 = vmatprep.subr.bf16.mxu0 0
        %2033 = vmatpush1.bf16.msra.mxu0 %v1729
        %2034 = vmatprep.subr.bf16.mxu0 0
        %2035 = vmatpush1.bf16.msra.mxu0 %v1730
        %2036 = vmatprep.mubr.bf16.mxu0 %v862
        %2037 = vmatmul.mubr.bf16.gmra.mrb[0].mxu0 %v1153
        %v2038 = vpop.f32.mrb[0].mxu0
        %v2039 = vadd.f32 %v1878, %v2038
        %v2040 = vpop.f32.mrb[0].mxu0
        %v2041 = vpop.f32.mrb[0].mxu0
        %v2042 = vadd.f32 %v1881, %v2041
        %v2043 = vpop.f32.mrb[0].mxu0
        %2044 = vmatprep.mubr.bf16.mxu0 %v863
        %2045 = vmatmul.mubr.bf16.gmra.mrb[0].mxu0 %v1156
        %v2046 = vpop.f32.mrb[0].mxu0
        %v2047 = vadd.f32 %v1886, %v2046
        %v2048 = vpop.f32.mrb[0].mxu0
        %v2049 = vpop.f32.mrb[0].mxu0
        %v2050 = vadd.f32 %v1889, %v2049
        %v2051 = vpop.f32.mrb[0].mxu0
        %2052 = vmatprep.mubr.bf16.mxu0 %v864
        %2053 = vmatmul.mubr.bf16.gmra.mrb[0].mxu0 %v1159
        %v2054 = vpop.f32.mrb[0].mxu0
        %v2055 = vadd.f32 %v1894, %v2054
        %v2056 = vpop.f32.mrb[0].mxu0
        %v2057 = vpop.f32.mrb[0].mxu0
        %v2058 = vadd.f32 %v1897, %v2057
        %v2059 = vpop.f32.mrb[0].mxu0
        %2060 = vmatprep.mubr.bf16.mxu0 %v865
        %2061 = vmatmul.mubr.bf16.gmra.mrb[0].mxu0 %v1162
        %v2062 = vpop.f32.mrb[0].mxu0
        %v2063 = vadd.f32 %v1902, %v2062
        %v2064 = vpop.f32.mrb[0].mxu0
        %v2065 = vpop.f32.mrb[0].mxu0
        %v2066 = vadd.f32 %v1905, %v2065
        %v2067 = vpop.f32.mrb[0].mxu0
        %2068 = vmatprep.mubr.bf16.mxu0 %v866
        %2069 = vmatmul.mubr.bf16.gmra.mrb[0].mxu0 %v1165
        %v2070 = vpop.f32.mrb[0].mxu0
        %v2071 = vadd.f32 %v1910, %v2070
        %v2072 = vpop.f32.mrb[0].mxu0
        %v2073 = vpop.f32.mrb[0].mxu0
        %v2074 = vadd.f32 %v1913, %v2073
        %v2075 = vpop.f32.mrb[0].mxu0
        %2076 = vmatprep.mubr.bf16.mxu0 %v867
        %2077 = vmatmul.mubr.bf16.gmra.mrb[0].mxu0 %v1168
        %v2078 = vpop.f32.mrb[0].mxu0
        %v2079 = vadd.f32 %v1918, %v2078
        %v2080 = vpop.f32.mrb[0].mxu0
        %v2081 = vpop.f32.mrb[0].mxu0
        %v2082 = vadd.f32 %v1921, %v2081
        %v2083 = vpop.f32.mrb[0].mxu0
        %2084 = vmatprep.mubr.bf16.mxu0 %v868
        %2085 = vmatmul.mubr.bf16.gmra.mrb[0].mxu0 %v1171
        %v2086 = vpop.f32.mrb[0].mxu0
        %v2087 = vadd.f32 %v1926, %v2086
        %v2088 = vpop.f32.mrb[0].mxu0
        %v2089 = vpop.f32.mrb[0].mxu0
        %v2090 = vadd.f32 %v1929, %v2089
        %v2091 = vpop.f32.mrb[0].mxu0
        %2092 = vmatprep.mubr.bf16.mxu0 %v869
        %2093 = vmatmul.mubr.bf16.gmra.mrb[0].mxu0 %v1174
        %v2094 = vpop.f32.mrb[0].mxu0
        %v2095 = vadd.f32 %v1934, %v2094
        %v2096 = vpop.f32.mrb[0].mxu0
        %v2097 = vpop.f32.mrb[0].mxu0
        %v2098 = vadd.f32 %v1937, %v2097
        %v2099 = vpop.f32.mrb[0].mxu0
        %2100 = vmatprep.mubr.bf16.mxu0 %v870
        %2101 = vmatmul.mubr.bf16.gmra.mrb[0].mxu0 %v1177
        %v2102 = vpop.f32.mrb[0].mxu0
        %v2103 = vadd.f32 %v1942, %v2102
        %v2104 = vpop.f32.mrb[0].mxu0
        %v2105 = vpop.f32.mrb[0].mxu0
        %v2106 = vadd.f32 %v1945, %v2105
        %v2107 = vpop.f32.mrb[0].mxu0
        %2108 = vmatprep.mubr.bf16.mxu0 %v871
        %2109 = vmatmul.mubr.bf16.gmra.mrb[0].mxu0 %v1180
        %v2110 = vpop.f32.mrb[0].mxu0
        %v2111 = vadd.f32 %v1950, %v2110
        %v2112 = vpop.f32.mrb[0].mxu0
        %v2113 = vpop.f32.mrb[0].mxu0
        %v2114 = vadd.f32 %v1953, %v2113
        %v2115 = vpop.f32.mrb[0].mxu0
        %2116 = vmatprep.mubr.bf16.mxu0 %v872
        %2117 = vmatmul.mubr.bf16.gmra.mrb[0].mxu0 %v1183
        %v2118 = vpop.f32.mrb[0].mxu0
        %v2119 = vadd.f32 %v1958, %v2118
        %v2120 = vpop.f32.mrb[0].mxu0
        %v2121 = vpop.f32.mrb[0].mxu0
        %v2122 = vadd.f32 %v1961, %v2121
        %v2123 = vpop.f32.mrb[0].mxu0
        %2124 = vmatprep.mubr.bf16.mxu0 %v873
        %2125 = vmatmul.mubr.bf16.gmra.mrb[0].mxu0 %v1186
        %v2126 = vpop.f32.mrb[0].mxu0
        %v2127 = vadd.f32 %v1966, %v2126
        %v2128 = vpop.f32.mrb[0].mxu0
        %v2129 = vpop.f32.mrb[0].mxu0
        %v2130 = vadd.f32 %v1969, %v2129
        %v2131 = vpop.f32.mrb[0].mxu0
        %2132 = vmatprep.mubr.bf16.mxu0 %v874
        %2133 = vmatmul.mubr.bf16.gmra.mrb[0].mxu0 %v1189
        %v2134 = vpop.f32.mrb[0].mxu0
        %v2135 = vadd.f32 %v1974, %v2134
        %v2136 = vpop.f32.mrb[0].mxu0
        %v2137 = vpop.f32.mrb[0].mxu0
        %v2138 = vadd.f32 %v1977, %v2137
        %v2139 = vpop.f32.mrb[0].mxu0
        %2140 = vmatprep.mubr.bf16.mxu0 %v875
        %2141 = vmatmul.mubr.bf16.gmra.mrb[0].mxu0 %v1192
        %v2142 = vpop.f32.mrb[0].mxu0
        %v2143 = vadd.f32 %v1982, %v2142
        %v2144 = vpop.f32.mrb[0].mxu0
        %v2145 = vpop.f32.mrb[0].mxu0
        %v2146 = vadd.f32 %v1985, %v2145
        %v2147 = vpop.f32.mrb[0].mxu0
        %2148 = vmatprep.mubr.bf16.mxu0 %v876
        %2149 = vmatmul.mubr.bf16.gmra.mrb[0].mxu0 %v1195
        %v2150 = vpop.f32.mrb[0].mxu0
        %v2151 = vadd.f32 %v1990, %v2150
        %v2152 = vpop.f32.mrb[0].mxu0
        %v2153 = vpop.f32.mrb[0].mxu0
        %v2154 = vadd.f32 %v1993, %v2153
        %v2155 = vpop.f32.mrb[0].mxu0
        %2156 = vmatprep.mubr.bf16.mxu0 %v1219
        %2157 = vmatmul.mubr.bf16.gmra.mrb[0].mxu0 %v1198
        %v2158 = vpop.f32.mrb[0].mxu0
        %v2159 = vadd.f32 %v1998, %v2158
        %v2160 = vpop.f32.mrb[0].mxu0
        %v2161 = vpop.f32.mrb[0].mxu0
        %v2162 = vadd.f32 %v2001, %v2161
        %v2163 = vpop.f32.mrb[0].mxu0
        %2164 = vdwg.mxu0
        %2165 = vmatprep.subr.bf16.mxu0 0
        %2166 = vmatpush1.bf16.msra.mxu0 %v1731
        %2167 = vmatprep.subr.bf16.mxu0 0
        %2168 = vmatpush1.bf16.msra.mxu0 %v1732
        %2169 = vmatprep.subr.bf16.mxu0 0
        %2170 = vmatpush1.bf16.msra.mxu0 %v1733
        %2171 = vmatprep.subr.bf16.mxu0 0
        %2172 = vmatpush1.bf16.msra.mxu0 %v1734
        %2173 = vmatprep.subr.bf16.mxu0 0
        %2174 = vmatpush1.bf16.msra.mxu0 %v1735
        %2175 = vmatprep.subr.bf16.mxu0 0
        %2176 = vmatpush1.bf16.msra.mxu0 %v1736
        %2177 = vmatprep.subr.bf16.mxu0 0
        %2178 = vmatpush1.bf16.msra.mxu0 %v1737
        %2179 = vmatprep.subr.bf16.mxu0 0
        %2180 = vmatpush1.bf16.msra.mxu0 %v1738
        %2181 = vmatprep.subr.bf16.mxu0 0
        %2182 = vmatpush1.bf16.msra.mxu0 %v1739
        %2183 = vmatprep.subr.bf16.mxu0 0
        %2184 = vmatpush1.bf16.msra.mxu0 %v1740
        %2185 = vmatprep.subr.bf16.mxu0 0
        %2186 = vmatpush1.bf16.msra.mxu0 %v1741
        %2187 = vmatprep.subr.bf16.mxu0 0
        %2188 = vmatpush1.bf16.msra.mxu0 %v1742
        %2189 = vmatprep.subr.bf16.mxu0 0
        %2190 = vmatpush1.bf16.msra.mxu0 %v1743
        %2191 = vmatprep.subr.bf16.mxu0 0
        %2192 = vmatpush1.bf16.msra.mxu0 %v1744
        %2193 = vmatprep.subr.bf16.mxu0 0
        %2194 = vmatpush1.bf16.msra.mxu0 %v1745
        %2195 = vmatprep.subr.bf16.mxu0 0
        %2196 = vmatpush1.bf16.msra.mxu0 %v1746
        %2197 = vmatprep.mubr.bf16.mxu0 %v1156
        %2198 = vmatmul.mubr.bf16.gmra.mrb[0].mxu0 %v965
        %v2199 = vpop.f32.mrb[0].mxu0
        %v2200 = vadd.f32 %v2039, %v2199
        %v2201 = vpop.f32.mrb[0].mxu0
        %v2202 = vpop.f32.mrb[0].mxu0
        %v2203 = vadd.f32 %v2042, %v2202
        %v2204 = vpop.f32.mrb[0].mxu0
        %2205 = vmatprep.mubr.bf16.mxu0 %v1159
        %2206 = vmatmul.mubr.bf16.gmra.mrb[0].mxu0 %v977
        %v2207 = vpop.f32.mrb[0].mxu0
        %v2208 = vadd.f32 %v2047, %v2207
        %v2209 = vpop.f32.mrb[0].mxu0
        %v2210 = vpop.f32.mrb[0].mxu0
        %v2211 = vadd.f32 %v2050, %v2210
        %v2212 = vpop.f32.mrb[0].mxu0
        %2213 = vmatprep.mubr.bf16.mxu0 %v1162
        %2214 = vmatmul.mubr.bf16.gmra.mrb[0].mxu0 %v989
        %v2215 = vpop.f32.mrb[0].mxu0
        %v2216 = vadd.f32 %v2055, %v2215
        %v2217 = vpop.f32.mrb[0].mxu0
        %v2218 = vpop.f32.mrb[0].mxu0
        %v2219 = vadd.f32 %v2058, %v2218
        %v2220 = vpop.f32.mrb[0].mxu0
        %2221 = vmatprep.mubr.bf16.mxu0 %v1165
        %2222 = vmatmul.mubr.bf16.gmra.mrb[0].mxu0 %v1001
        %v2223 = vpop.f32.mrb[0].mxu0
        %v2224 = vadd.f32 %v2063, %v2223
        %v2225 = vpop.f32.mrb[0].mxu0
        %v2226 = vpop.f32.mrb[0].mxu0
        %v2227 = vadd.f32 %v2066, %v2226
        %v2228 = vpop.f32.mrb[0].mxu0
        %2229 = vmatprep.mubr.bf16.mxu0 %v1168
        %2230 = vmatmul.mubr.bf16.gmra.mrb[0].mxu0 %v1013
        %v2231 = vpop.f32.mrb[0].mxu0
        %v2232 = vadd.f32 %v2071, %v2231
        %v2233 = vpop.f32.mrb[0].mxu0
        %v2234 = vpop.f32.mrb[0].mxu0
        %v2235 = vadd.f32 %v2074, %v2234
        %v2236 = vpop.f32.mrb[0].mxu0
        %2237 = vmatprep.mubr.bf16.mxu0 %v1171
        %2238 = vmatmul.mubr.bf16.gmra.mrb[0].mxu0 %v1025
        %v2239 = vpop.f32.mrb[0].mxu0
        %v2240 = vadd.f32 %v2079, %v2239
        %v2241 = vpop.f32.mrb[0].mxu0
        %v2242 = vpop.f32.mrb[0].mxu0
        %v2243 = vadd.f32 %v2082, %v2242
        %v2244 = vpop.f32.mrb[0].mxu0
        %2245 = vmatprep.mubr.bf16.mxu0 %v1174
        %2246 = vmatmul.mubr.bf16.gmra.mrb[0].mxu0 %v1037
        %v2247 = vpop.f32.mrb[0].mxu0
        %v2248 = vadd.f32 %v2087, %v2247
        %v2249 = vpop.f32.mrb[0].mxu0
        %v2250 = vpop.f32.mrb[0].mxu0
        %v2251 = vadd.f32 %v2090, %v2250
        %v2252 = vpop.f32.mrb[0].mxu0
        %2253 = vmatprep.mubr.bf16.mxu0 %v1177
        %2254 = vmatmul.mubr.bf16.gmra.mrb[0].mxu0 %v1049
        %v2255 = vpop.f32.mrb[0].mxu0
        %v2256 = vadd.f32 %v2095, %v2255
        %v2257 = vpop.f32.mrb[0].mxu0
        %v2258 = vpop.f32.mrb[0].mxu0
        %v2259 = vadd.f32 %v2098, %v2258
        %v2260 = vpop.f32.mrb[0].mxu0
        %2261 = vmatprep.mubr.bf16.mxu0 %v1180
        %2262 = vmatmul.mubr.bf16.gmra.mrb[0].mxu0 %v1061
        %v2263 = vpop.f32.mrb[0].mxu0
        %v2264 = vadd.f32 %v2103, %v2263
        %v2265 = vpop.f32.mrb[0].mxu0
        %v2266 = vpop.f32.mrb[0].mxu0
        %v2267 = vadd.f32 %v2106, %v2266
        %v2268 = vpop.f32.mrb[0].mxu0
        %2269 = vmatprep.mubr.bf16.mxu0 %v1183
        %2270 = vmatmul.mubr.bf16.gmra.mrb[0].mxu0 %v1073
        %v2271 = vpop.f32.mrb[0].mxu0
        %v2272 = vadd.f32 %v2111, %v2271
        %v2273 = vpop.f32.mrb[0].mxu0
        %v2274 = vpop.f32.mrb[0].mxu0
        %v2275 = vadd.f32 %v2114, %v2274
        %v2276 = vpop.f32.mrb[0].mxu0
        %2277 = vmatprep.mubr.bf16.mxu0 %v1186
        %2278 = vmatmul.mubr.bf16.gmra.mrb[0].mxu0 %v1085
        %v2279 = vpop.f32.mrb[0].mxu0
        %v2280 = vadd.f32 %v2119, %v2279
        %v2281 = vpop.f32.mrb[0].mxu0
        %v2282 = vpop.f32.mrb[0].mxu0
        %v2283 = vadd.f32 %v2122, %v2282
        %v2284 = vpop.f32.mrb[0].mxu0
        %2285 = vmatprep.mubr.bf16.mxu0 %v1189
        %2286 = vmatmul.mubr.bf16.gmra.mrb[0].mxu0 %v1097
        %v2287 = vpop.f32.mrb[0].mxu0
        %v2288 = vadd.f32 %v2127, %v2287
        %v2289 = vpop.f32.mrb[0].mxu0
        %v2290 = vpop.f32.mrb[0].mxu0
        %v2291 = vadd.f32 %v2130, %v2290
        %v2292 = vpop.f32.mrb[0].mxu0
        %2293 = vmatprep.mubr.bf16.mxu0 %v1192
        %2294 = vmatmul.mubr.bf16.gmra.mrb[0].mxu0 %v1109
        %v2295 = vpop.f32.mrb[0].mxu0
        %v2296 = vadd.f32 %v2135, %v2295
        %v2297 = vpop.f32.mrb[0].mxu0
        %v2298 = vpop.f32.mrb[0].mxu0
        %v2299 = vadd.f32 %v2138, %v2298
        %v2300 = vpop.f32.mrb[0].mxu0
        %2301 = vmatprep.mubr.bf16.mxu0 %v1195
        %2302 = vmatmul.mubr.bf16.gmra.mrb[0].mxu0 %v1121
        %v2303 = vpop.f32.mrb[0].mxu0
        %v2304 = vadd.f32 %v2143, %v2303
        %v2305 = vpop.f32.mrb[0].mxu0
        %v2306 = vpop.f32.mrb[0].mxu0
        %v2307 = vadd.f32 %v2146, %v2306
        %v2308 = vpop.f32.mrb[0].mxu0
        %2309 = vmatprep.mubr.bf16.mxu0 %v1198
        %2310 = vmatmul.mubr.bf16.gmra.mrb[0].mxu0 %v1133
        %v2311 = vpop.f32.mrb[0].mxu0
        %v2312 = vadd.f32 %v2151, %v2311
        %v2313 = vpop.f32.mrb[0].mxu0
        %v2314 = vpop.f32.mrb[0].mxu0
        %v2315 = vadd.f32 %v2154, %v2314
        %v2316 = vpop.f32.mrb[0].mxu0
        %2317 = vmatprep.mubr.bf16.mxu0 %v1239
        %2318 = vmatmul.mubr.bf16.gmra.mrb[0].mxu0 %v1235
        %v2319 = vpop.f32.mrb[0].mxu0
        %v2320 = vadd.f32 %v2159, %v2319
        %v2321 = vpop.f32.mrb[0].mxu0
        %v2322 = vpop.f32.mrb[0].mxu0
        %v2323 = vadd.f32 %v2162, %v2322
        %v2324 = vpop.f32.mrb[0].mxu0
        %2325 = vdwg.mxu0
        %2326 = vmatprep.subr.bf16.mxu0 0
        %2327 = vmatpush1.bf16.msra.mxu0 %v1747
        %2328 = vmatprep.subr.bf16.mxu0 0
        %2329 = vmatpush1.bf16.msra.mxu0 %v1748
        %2330 = vmatprep.subr.bf16.mxu0 0
        %2331 = vmatpush1.bf16.msra.mxu0 %v1749
        %2332 = vmatprep.subr.bf16.mxu0 0
        %2333 = vmatpush1.bf16.msra.mxu0 %v1750
        %2334 = vmatprep.subr.bf16.mxu0 0
        %2335 = vmatpush1.bf16.msra.mxu0 %v1751
        %2336 = vmatprep.subr.bf16.mxu0 0
        %2337 = vmatpush1.bf16.msra.mxu0 %v1752
        %2338 = vmatprep.subr.bf16.mxu0 0
        %2339 = vmatpush1.bf16.msra.mxu0 %v1753
        %2340 = vmatprep.subr.bf16.mxu0 0
        %2341 = vmatpush1.bf16.msra.mxu0 %v1754
        %2342 = vmatprep.subr.bf16.mxu0 0
        %2343 = vmatpush1.bf16.msra.mxu0 %v1755
        %2344 = vmatprep.subr.bf16.mxu0 0
        %2345 = vmatpush1.bf16.msra.mxu0 %v1756
        %2346 = vmatprep.subr.bf16.mxu0 0
        %2347 = vmatpush1.bf16.msra.mxu0 %v1757
        %2348 = vmatprep.subr.bf16.mxu0 0
        %2349 = vmatpush1.bf16.msra.mxu0 %v1758
        %2350 = vmatprep.subr.bf16.mxu0 0
        %2351 = vmatpush1.bf16.msra.mxu0 %v1759
        %2352 = vmatprep.subr.bf16.mxu0 0
        %2353 = vmatpush1.bf16.msra.mxu0 %v1760
        %2354 = vmatprep.subr.bf16.mxu0 0
        %2355 = vmatpush1.bf16.msra.mxu0 %v1761
        %2356 = vmatprep.subr.bf16.mxu0 0
        %2357 = vmatpush1.bf16.msra.mxu0 %v1762
        %2358 = vmatprep.mubr.bf16.mxu0 %v977
        %2359 = vmatmul.mubr.bf16.gmra.mrb[0].mxu0 %v863
        %v2360 = vpop.f32.mrb[0].mxu0
        %v2361 = vadd.f32 %v2200, %v2360
        %v2362 = vpop.f32.mrb[0].mxu0
        %v2363 = vpop.f32.mrb[0].mxu0
        %v2364 = vadd.f32 %v2203, %v2363
        %v2365 = vpop.f32.mrb[0].mxu0
        %2366 = vmatprep.mubr.bf16.mxu0 %v989
        %2367 = vmatmul.mubr.bf16.gmra.mrb[0].mxu0 %v864
        %v2368 = vpop.f32.mrb[0].mxu0
        %v2369 = vadd.f32 %v2208, %v2368
        %v2370 = vpop.f32.mrb[0].mxu0
        %v2371 = vpop.f32.mrb[0].mxu0
        %v2372 = vadd.f32 %v2211, %v2371
        %v2373 = vpop.f32.mrb[0].mxu0
        %2374 = vmatprep.mubr.bf16.mxu0 %v1001
        %2375 = vmatmul.mubr.bf16.gmra.mrb[0].mxu0 %v865
        %v2376 = vpop.f32.mrb[0].mxu0
        %v2377 = vadd.f32 %v2216, %v2376
        %v2378 = vpop.f32.mrb[0].mxu0
        %v2379 = vpop.f32.mrb[0].mxu0
        %v2380 = vadd.f32 %v2219, %v2379
        %v2381 = vpop.f32.mrb[0].mxu0
        %2382 = vmatprep.mubr.bf16.mxu0 %v1013
        %2383 = vmatmul.mubr.bf16.gmra.mrb[0].mxu0 %v866
        %v2384 = vpop.f32.mrb[0].mxu0
        %v2385 = vadd.f32 %v2224, %v2384
        %v2386 = vpop.f32.mrb[0].mxu0
        %v2387 = vpop.f32.mrb[0].mxu0
        %v2388 = vadd.f32 %v2227, %v2387
        %v2389 = vpop.f32.mrb[0].mxu0
        %2390 = vmatprep.mubr.bf16.mxu0 %v1025
        %2391 = vmatmul.mubr.bf16.gmra.mrb[0].mxu0 %v867
        %v2392 = vpop.f32.mrb[0].mxu0
        %v2393 = vadd.f32 %v2232, %v2392
        %v2394 = vpop.f32.mrb[0].mxu0
        %v2395 = vpop.f32.mrb[0].mxu0
        %v2396 = vadd.f32 %v2235, %v2395
        %v2397 = vpop.f32.mrb[0].mxu0
        %2398 = vmatprep.mubr.bf16.mxu0 %v1037
        %2399 = vmatmul.mubr.bf16.gmra.mrb[0].mxu0 %v868
        %v2400 = vpop.f32.mrb[0].mxu0
        %v2401 = vadd.f32 %v2240, %v2400
        %v2402 = vpop.f32.mrb[0].mxu0
        %v2403 = vpop.f32.mrb[0].mxu0
        %v2404 = vadd.f32 %v2243, %v2403
        %v2405 = vpop.f32.mrb[0].mxu0
        %2406 = vmatprep.mubr.bf16.mxu0 %v1049
        %2407 = vmatmul.mubr.bf16.gmra.mrb[0].mxu0 %v869
        %v2408 = vpop.f32.mrb[0].mxu0
        %v2409 = vadd.f32 %v2248, %v2408
        %v2410 = vpop.f32.mrb[0].mxu0
        %v2411 = vpop.f32.mrb[0].mxu0
        %v2412 = vadd.f32 %v2251, %v2411
        %v2413 = vpop.f32.mrb[0].mxu0
        %2414 = vmatprep.mubr.bf16.mxu0 %v1061
        %2415 = vmatmul.mubr.bf16.gmra.mrb[0].mxu0 %v870
        %v2416 = vpop.f32.mrb[0].mxu0
        %v2417 = vadd.f32 %v2256, %v2416
        %v2418 = vpop.f32.mrb[0].mxu0
        %v2419 = vpop.f32.mrb[0].mxu0
        %v2420 = vadd.f32 %v2259, %v2419
        %v2421 = vpop.f32.mrb[0].mxu0
        %2422 = vmatprep.mubr.bf16.mxu0 %v1073
        %2423 = vmatmul.mubr.bf16.gmra.mrb[0].mxu0 %v871
        %v2424 = vpop.f32.mrb[0].mxu0
        %v2425 = vadd.f32 %v2264, %v2424
        %v2426 = vpop.f32.mrb[0].mxu0
        %v2427 = vpop.f32.mrb[0].mxu0
        %v2428 = vadd.f32 %v2267, %v2427
        %v2429 = vpop.f32.mrb[0].mxu0
        %2430 = vmatprep.mubr.bf16.mxu0 %v1085
        %2431 = vmatmul.mubr.bf16.gmra.mrb[0].mxu0 %v872
        %v2432 = vpop.f32.mrb[0].mxu0
        %v2433 = vadd.f32 %v2272, %v2432
        %v2434 = vpop.f32.mrb[0].mxu0
        %v2435 = vpop.f32.mrb[0].mxu0
        %v2436 = vadd.f32 %v2275, %v2435
        %v2437 = vpop.f32.mrb[0].mxu0
        %2438 = vmatprep.mubr.bf16.mxu0 %v1097
        %2439 = vmatmul.mubr.bf16.gmra.mrb[0].mxu0 %v873
        %v2440 = vpop.f32.mrb[0].mxu0
        %v2441 = vadd.f32 %v2280, %v2440
        %v2442 = vpop.f32.mrb[0].mxu0
        %v2443 = vpop.f32.mrb[0].mxu0
        %v2444 = vadd.f32 %v2283, %v2443
        %v2445 = vpop.f32.mrb[0].mxu0
        %2446 = vmatprep.mubr.bf16.mxu0 %v1109
        %2447 = vmatmul.mubr.bf16.gmra.mrb[0].mxu0 %v874
        %v2448 = vpop.f32.mrb[0].mxu0
        %v2449 = vadd.f32 %v2288, %v2448
        %v2450 = vpop.f32.mrb[0].mxu0
        %v2451 = vpop.f32.mrb[0].mxu0
        %v2452 = vadd.f32 %v2291, %v2451
        %v2453 = vpop.f32.mrb[0].mxu0
        %2454 = vmatprep.mubr.bf16.mxu0 %v1121
        %2455 = vmatmul.mubr.bf16.gmra.mrb[0].mxu0 %v875
        %v2456 = vpop.f32.mrb[0].mxu0
        %v2457 = vadd.f32 %v2296, %v2456
        %v2458 = vpop.f32.mrb[0].mxu0
        %v2459 = vpop.f32.mrb[0].mxu0
        %v2460 = vadd.f32 %v2299, %v2459
        %v2461 = vpop.f32.mrb[0].mxu0
        %2462 = vmatprep.mubr.bf16.mxu0 %v1133
        %2463 = vmatmul.mubr.bf16.gmra.mrb[0].mxu0 %v876
        %v2464 = vpop.f32.mrb[0].mxu0
        %v2465 = vadd.f32 %v2304, %v2464
        %v2466 = vpop.f32.mrb[0].mxu0
        %v2467 = vpop.f32.mrb[0].mxu0
        %v2468 = vadd.f32 %v2307, %v2467
        %v2469 = vpop.f32.mrb[0].mxu0
        %2470 = vmatprep.mubr.bf16.mxu0 %v1235
        %2471 = vmatmul.mubr.bf16.gmra.mrb[0].mxu0 %v1219
        %v2472 = vpop.f32.mrb[0].mxu0
        %v2473 = vadd.f32 %v2312, %v2472
        %v2474 = vpop.f32.mrb[0].mxu0
        %v2475 = vpop.f32.mrb[0].mxu0
        %v2476 = vadd.f32 %v2315, %v2475
        %v2477 = vpop.f32.mrb[0].mxu0
        %2478 = vmatprep.mubr.bf16.mxu0 %v1261
        %2479 = vmatmul.mubr.bf16.gmra.mrb[0].mxu0 %v1245
        %v2480 = vpop.f32.mrb[0].mxu0
        %v2481 = vadd.f32 %v2320, %v2480
        %v2482 = vpop.f32.mrb[0].mxu0
        %v2483 = vpop.f32.mrb[0].mxu0
        %v2484 = vadd.f32 %v2323, %v2483
        %v2485 = vpop.f32.mrb[0].mxu0
        %2486 = vdwg.mxu0
        %2487 = vmatprep.subr.bf16.mxu0 0
        %2488 = vmatpush1.bf16.msra.mxu0 %v1763
        %2489 = vmatprep.subr.bf16.mxu0 0
        %2490 = vmatpush1.bf16.msra.mxu0 %v1764
        %2491 = vmatprep.subr.bf16.mxu0 0
        %2492 = vmatpush1.bf16.msra.mxu0 %v1765
        %2493 = vmatprep.subr.bf16.mxu0 0
        %2494 = vmatpush1.bf16.msra.mxu0 %v1766
        %2495 = vmatprep.subr.bf16.mxu0 0
        %2496 = vmatpush1.bf16.msra.mxu0 %v1767
        %2497 = vmatprep.subr.bf16.mxu0 0
        %2498 = vmatpush1.bf16.msra.mxu0 %v1768
        %2499 = vmatprep.subr.bf16.mxu0 0
        %2500 = vmatpush1.bf16.msra.mxu0 %v1769
        %2501 = vmatprep.subr.bf16.mxu0 0
        %2502 = vmatpush1.bf16.msra.mxu0 %v1770
        %2503 = vmatprep.subr.bf16.mxu0 0
        %2504 = vmatpush1.bf16.msra.mxu0 0
        %2505 = vmatprep.subr.bf16.mxu0 0
        %2506 = vmatpush1.bf16.msra.mxu0 0
        %2507 = vmatprep.subr.bf16.mxu0 0
        %2508 = vmatpush1.bf16.msra.mxu0 0
        %2509 = vmatprep.subr.bf16.mxu0 0
        %2510 = vmatpush1.bf16.msra.mxu0 0
        %2511 = vmatprep.subr.bf16.mxu0 0
        %2512 = vmatpush1.bf16.msra.mxu0 0
        %2513 = vmatprep.subr.bf16.mxu0 0
        %2514 = vmatpush1.bf16.msra.mxu0 0
        %2515 = vmatprep.subr.bf16.mxu0 0
        %2516 = vmatpush1.bf16.msra.mxu0 0
        %2517 = vmatprep.subr.bf16.mxu0 0
        %2518 = vmatpush1.bf16.msra.mxu0 0
        %2519 = vmatprep.mubr.bf16.mxu0 0
        %2520 = vmatmul.mubr.bf16.gmra.mrb[0].mxu0 %v1159
        %v2521 = vpop.f32.mrb[0].mxu0
        %v2522 = vadd.f32 %v2361, %v2521
        %v2523 = vpop.f32.mrb[0].mxu0
        %v2524 = vpop.f32.mrb[0].mxu0
        %v2525 = vadd.f32 %v2364, %v2524
        %v2526 = vpop.f32.mrb[0].mxu0
        %2527 = vmatprep.mubr.bf16.mxu0 0
        %2528 = vmatmul.mubr.bf16.gmra.mrb[0].mxu0 %v1162
        %v2529 = vpop.f32.mrb[0].mxu0
        %v2530 = vadd.f32 %v2369, %v2529
        %v2531 = vpop.f32.mrb[0].mxu0
        %v2532 = vpop.f32.mrb[0].mxu0
        %v2533 = vadd.f32 %v2372, %v2532
        %v2534 = vpop.f32.mrb[0].mxu0
        %2535 = vmatprep.mubr.bf16.mxu0 0
        %2536 = vmatmul.mubr.bf16.gmra.mrb[0].mxu0 %v1165
        %v2537 = vpop.f32.mrb[0].mxu0
        %v2538 = vadd.f32 %v2377, %v2537
        %v2539 = vpop.f32.mrb[0].mxu0
        %v2540 = vpop.f32.mrb[0].mxu0
        %v2541 = vadd.f32 %v2380, %v2540
        %v2542 = vpop.f32.mrb[0].mxu0
        %2543 = vmatprep.mubr.bf16.mxu0 0
        %2544 = vmatmul.mubr.bf16.gmra.mrb[0].mxu0 %v1168
        %v2545 = vpop.f32.mrb[0].mxu0
        %v2546 = vadd.f32 %v2385, %v2545
        %v2547 = vpop.f32.mrb[0].mxu0
        %v2548 = vpop.f32.mrb[0].mxu0
        %v2549 = vadd.f32 %v2388, %v2548
        %v2550 = vpop.f32.mrb[0].mxu0
        %2551 = vmatprep.mubr.bf16.mxu0 0
        %2552 = vmatmul.mubr.bf16.gmra.mrb[0].mxu0 %v1171
        %v2553 = vpop.f32.mrb[0].mxu0
        %v2554 = vadd.f32 %v2393, %v2553
        %v2555 = vpop.f32.mrb[0].mxu0
        %v2556 = vpop.f32.mrb[0].mxu0
        %v2557 = vadd.f32 %v2396, %v2556
        %v2558 = vpop.f32.mrb[0].mxu0
        %2559 = vmatprep.mubr.bf16.mxu0 0
        %2560 = vmatmul.mubr.bf16.gmra.mrb[0].mxu0 %v1174
        %v2561 = vpop.f32.mrb[0].mxu0
        %v2562 = vadd.f32 %v2401, %v2561
        %v2563 = vpop.f32.mrb[0].mxu0
        %v2564 = vpop.f32.mrb[0].mxu0
        %v2565 = vadd.f32 %v2404, %v2564
        %v2566 = vpop.f32.mrb[0].mxu0
        %2567 = vmatprep.mubr.bf16.mxu0 0
        %2568 = vmatmul.mubr.bf16.gmra.mrb[0].mxu0 %v1177
        %v2569 = vpop.f32.mrb[0].mxu0
        %v2570 = vadd.f32 %v2409, %v2569
        %v2571 = vpop.f32.mrb[0].mxu0
        %v2572 = vpop.f32.mrb[0].mxu0
        %v2573 = vadd.f32 %v2412, %v2572
        %v2574 = vpop.f32.mrb[0].mxu0
        %2575 = vmatprep.mubr.bf16.mxu0 0
        %2576 = vmatmul.mubr.bf16.gmra.mrb[0].mxu0 %v1180
        %v2577 = vpop.f32.mrb[0].mxu0
        %v2578 = vadd.f32 %v2417, %v2577
        %v2579 = vpop.f32.mrb[0].mxu0
        %v2580 = vpop.f32.mrb[0].mxu0
        %v2581 = vadd.f32 %v2420, %v2580
        %v2582 = vpop.f32.mrb[0].mxu0
        %2583 = vmatprep.mubr.bf16.mxu0 0
        %2584 = vmatmul.mubr.bf16.gmra.mrb[0].mxu0 %v1183
        %v2585 = vpop.f32.mrb[0].mxu0
        %v2586 = vadd.f32 %v2425, %v2585
        %v2587 = vpop.f32.mrb[0].mxu0
        %v2588 = vpop.f32.mrb[0].mxu0
        %v2589 = vadd.f32 %v2428, %v2588
        %v2590 = vpop.f32.mrb[0].mxu0
        %2591 = vmatprep.mubr.bf16.mxu0 0
        %2592 = vmatmul.mubr.bf16.gmra.mrb[0].mxu0 %v1186
        %v2593 = vpop.f32.mrb[0].mxu0
        %v2594 = vadd.f32 %v2433, %v2593
        %v2595 = vpop.f32.mrb[0].mxu0
        %v2596 = vpop.f32.mrb[0].mxu0
        %v2597 = vadd.f32 %v2436, %v2596
        %v2598 = vpop.f32.mrb[0].mxu0
        %2599 = vmatprep.mubr.bf16.mxu0 0
        %2600 = vmatmul.mubr.bf16.gmra.mrb[0].mxu0 %v1189
        %v2601 = vpop.f32.mrb[0].mxu0
        %v2602 = vadd.f32 %v2441, %v2601
        %v2603 = vpop.f32.mrb[0].mxu0
        %v2604 = vpop.f32.mrb[0].mxu0
        %v2605 = vadd.f32 %v2444, %v2604
        %v2606 = vpop.f32.mrb[0].mxu0
        %2607 = vmatprep.mubr.bf16.mxu0 0
        %2608 = vmatmul.mubr.bf16.gmra.mrb[0].mxu0 %v1192
        %v2609 = vpop.f32.mrb[0].mxu0
        %v2610 = vadd.f32 %v2449, %v2609
        %v2611 = vpop.f32.mrb[0].mxu0
        %v2612 = vpop.f32.mrb[0].mxu0
        %v2613 = vadd.f32 %v2452, %v2612
        %v2614 = vpop.f32.mrb[0].mxu0
        %2615 = vmatprep.mubr.bf16.mxu0 0
        %2616 = vmatmul.mubr.bf16.gmra.mrb[0].mxu0 %v1195
        %v2617 = vpop.f32.mrb[0].mxu0
        %v2618 = vadd.f32 %v2457, %v2617
        %v2619 = vpop.f32.mrb[0].mxu0
        %v2620 = vpop.f32.mrb[0].mxu0
        %v2621 = vadd.f32 %v2460, %v2620
        %v2622 = vpop.f32.mrb[0].mxu0
        %2623 = vmatprep.mubr.bf16.mxu0 0
        %2624 = vmatmul.mubr.bf16.gmra.mrb[0].mxu0 %v1198
        %v2625 = vpop.f32.mrb[0].mxu0
        %v2626 = vadd.f32 %v2465, %v2625
        %v2627 = vpop.f32.mrb[0].mxu0
        %v2628 = vpop.f32.mrb[0].mxu0
        %v2629 = vadd.f32 %v2468, %v2628
        %v2630 = vpop.f32.mrb[0].mxu0
        %2631 = vmatprep.mubr.bf16.mxu0 0
        %2632 = vmatmul.mubr.bf16.gmra.mrb[0].mxu0 %v1239
        %v2633 = vpop.f32.mrb[0].mxu0
        %v2634 = vadd.f32 %v2473, %v2633
        %v2635 = vpop.f32.mrb[0].mxu0
        %v2636 = vpop.f32.mrb[0].mxu0
        %v2637 = vadd.f32 %v2476, %v2636
        %v2638 = vpop.f32.mrb[0].mxu0
        %2639 = vmatprep.mubr.bf16.mxu0 0
        %2640 = vmatmul.mubr.bf16.gmra.mrb[0].mxu0 %v1265
        %v2641 = vpop.f32.mrb[0].mxu0
        %v2642 = vadd.f32 %v2481, %v2641
        %v2643 = vpop.f32.mrb[0].mxu0
        %v2644 = vpop.f32.mrb[0].mxu0
        %v2645 = vadd.f32 %v2484, %v2644
        %v2646 = vpop.f32.mrb[0].mxu0
        %2647 = vdwg.mxu0
        %v2648 = vadd.f32 %v2522, %v2525
        %v2649 = vadd.f32 %v2648, %v2530
        %v2650 = vadd.f32 %v2649, %v2533
        %v2651 = vadd.f32 %v2650, %v2538
        %v2652 = vadd.f32 %v2651, %v2541
        %v2653 = vadd.f32 %v2652, %v2546
        %v2654 = vadd.f32 %v2653, %v2549
        %v2655 = vadd.f32 %v2654, %v2554
        %v2656 = vadd.f32 %v2655, %v2557
        %v2657 = vadd.f32 %v2656, %v2562
        %v2658 = vadd.f32 %v2657, %v2565
        %v2659 = vadd.f32 %v2658, %v2570
        %v2660 = vadd.f32 %v2659, %v2573
        %v2661 = vadd.f32 %v2660, %v2578
        %v2662 = vadd.f32 %v2661, %v2581
        %v2663 = vadd.f32 %v2662, %v2586
        %v2664 = vadd.f32 %v2663, %v2589
        %v2665 = vadd.f32 %v2664, %v2594
        %v2666 = vadd.f32 %v2665, %v2597
        %v2667 = vadd.f32 %v2666, %v2602
        %v2668 = vadd.f32 %v2667, %v2605
        %v2669 = vadd.f32 %v2668, %v2610
        %v2670 = vadd.f32 %v2669, %v2613
        %v2671 = vadd.f32 %v2670, %v2618
        %v2672 = vadd.f32 %v2671, %v2621
        %v2673 = vadd.f32 %v2672, %v2626
        %v2674 = vadd.f32 %v2673, %v2629
        %v2675 = vadd.f32 %v2674, %v2634
        %v2676 = vadd.f32 %v2675, %v2637
        %v2677 = vadd.f32 %v2676, %v2642
        %v2678 = vadd.f32 %v2677, %v2645
        %v2679 = vrot.slane %v2678, 4
        %v2680 = vadd.f32 %v2678, %v2679
        %v2681 = vrot.slane %v2680, 2
        %v2682 = vadd.f32 %v2680, %v2681
        %v2683 = vrot.slane %v2682, 1
        %v2684 = vadd.f32 %v2682, %v2683
        %2685 = vst [vmem:[%s214] sm:$0x1] %v2684
        %v2686 = vmul.f32 %v2522, %v2522
        %v2687 = vmul.f32 %v2525, %v2525
        %v2688 = vmul.f32 %v2530, %v2530
        %v2689 = vmul.f32 %v2533, %v2533
        %v2690 = vmul.f32 %v2538, %v2538
        %v2691 = vmul.f32 %v2541, %v2541
        %v2692 = vmul.f32 %v2546, %v2546
        %v2693 = vmul.f32 %v2549, %v2549
        %v2694 = vmul.f32 %v2554, %v2554
        %v2695 = vmul.f32 %v2557, %v2557
        %v2696 = vmul.f32 %v2562, %v2562
        %v2697 = vmul.f32 %v2565, %v2565
        %v2698 = vmul.f32 %v2570, %v2570
        %v2699 = vmul.f32 %v2573, %v2573
        %v2700 = vmul.f32 %v2578, %v2578
        %v2701 = vmul.f32 %v2581, %v2581
        %v2702 = vmul.f32 %v2586, %v2586
        %v2703 = vmul.f32 %v2589, %v2589
        %v2704 = vmul.f32 %v2594, %v2594
        %v2705 = vmul.f32 %v2597, %v2597
        %v2706 = vmul.f32 %v2602, %v2602
        %v2707 = vmul.f32 %v2605, %v2605
        %v2708 = vmul.f32 %v2610, %v2610
        %v2709 = vmul.f32 %v2613, %v2613
        %v2710 = vmul.f32 %v2618, %v2618
        %v2711 = vmul.f32 %v2621, %v2621
        %v2712 = vmul.f32 %v2626, %v2626
        %v2713 = vmul.f32 %v2629, %v2629
        %v2714 = vmul.f32 %v2634, %v2634
        %v2715 = vmul.f32 %v2637, %v2637
        %v2716 = vmul.f32 %v2642, %v2642
        %v2717 = vmul.f32 %v2645, %v2645
        %v2718 = vadd.f32 %v2686, %v2687
        %v2719 = vadd.f32 %v2718, %v2688
        %v2720 = vadd.f32 %v2719, %v2689
        %v2721 = vadd.f32 %v2720, %v2690
        %v2722 = vadd.f32 %v2721, %v2691
        %v2723 = vadd.f32 %v2722, %v2692
        %v2724 = vadd.f32 %v2723, %v2693
        %v2725 = vadd.f32 %v2724, %v2694
        %v2726 = vadd.f32 %v2725, %v2695
        %v2727 = vadd.f32 %v2726, %v2696
        %v2728 = vadd.f32 %v2727, %v2697
        %v2729 = vadd.f32 %v2728, %v2698
        %v2730 = vadd.f32 %v2729, %v2699
        %v2731 = vadd.f32 %v2730, %v2700
        %v2732 = vadd.f32 %v2731, %v2701
        %v2733 = vadd.f32 %v2732, %v2702
        %v2734 = vadd.f32 %v2733, %v2703
        %v2735 = vadd.f32 %v2734, %v2704
        %v2736 = vadd.f32 %v2735, %v2705
        %v2737 = vadd.f32 %v2736, %v2706
        %v2738 = vadd.f32 %v2737, %v2707
        %v2739 = vadd.f32 %v2738, %v2708
        %v2740 = vadd.f32 %v2739, %v2709
        %v2741 = vadd.f32 %v2740, %v2710
        %v2742 = vadd.f32 %v2741, %v2711
        %v2743 = vadd.f32 %v2742, %v2712
        %v2744 = vadd.f32 %v2743, %v2713
        %v2745 = vadd.f32 %v2744, %v2714
        %v2746 = vadd.f32 %v2745, %v2715
        %v2747 = vadd.f32 %v2746, %v2716
        %v2748 = vadd.f32 %v2747, %v2717
        %v2749 = vrot.slane %v2748, 4
        %v2750 = vadd.f32 %v2748, %v2749
        %v2751 = vrot.slane %v2750, 2
        %v2752 = vadd.f32 %v2750, %v2751
        %v2753 = vrot.slane %v2752, 1
        %v2754 = vadd.f32 %v2752, %v2753
        %2755 = vst [vmem:[%s214 + $0x1] sm:$0x1] %v2754
        %v2756 = vpack.c.bf16 %v2525, %v2522
        %v2757 = vpack.c.bf16 %v2533, %v2530
        %v2758 = vpack.c.bf16 %v2541, %v2538
        %v2759 = vpack.c.bf16 %v2549, %v2546
        %v2760 = vpack.c.bf16 %v2557, %v2554
        %v2761 = vpack.c.bf16 %v2565, %v2562
        %v2762 = vpack.c.bf16 %v2573, %v2570
        %v2763 = vpack.c.bf16 %v2581, %v2578
        %v2764 = vpack.c.bf16 %v2589, %v2586
        %v2765 = vpack.c.bf16 %v2597, %v2594
        %v2766 = vpack.c.bf16 %v2605, %v2602
        %v2767 = vpack.c.bf16 %v2613, %v2610
        %v2768 = vpack.c.bf16 %v2621, %v2618
        %v2769 = vpack.c.bf16 %v2629, %v2626
        %v2770 = vpack.c.bf16 %v2637, %v2634
        %v2771 = vpack.c.bf16 %v2645, %v2642
        %v2788 = vunpack.c.l.b16 %v2756
        %v2789 = vunpack.c.h.b16 %v2756
        %v2790 = vunpack.c.l.b16 %v2757
        %v2791 = vunpack.c.h.b16 %v2757
        %v2792 = vunpack.c.l.b16 %v2758
        %v2793 = vunpack.c.h.b16 %v2758
        %v2794 = vunpack.c.l.b16 %v2759
        %v2795 = vunpack.c.h.b16 %v2759
        %v2796 = vunpack.c.l.b16 %v2760
        %v2797 = vunpack.c.h.b16 %v2760
        %v2798 = vunpack.c.l.b16 %v2761
        %v2799 = vunpack.c.h.b16 %v2761
        %v2800 = vunpack.c.l.b16 %v2762
        %v2801 = vunpack.c.h.b16 %v2762
        %v2802 = vunpack.c.l.b16 %v2763
        %v2803 = vunpack.c.h.b16 %v2763
        %v2804 = vunpack.c.l.b16 %v2764
        %v2805 = vunpack.c.h.b16 %v2764
        %v2806 = vunpack.c.l.b16 %v2765
        %v2807 = vunpack.c.h.b16 %v2765
        %v2808 = vunpack.c.l.b16 %v2766
        %v2809 = vunpack.c.h.b16 %v2766
        %v2810 = vunpack.c.l.b16 %v2767
        %v2811 = vunpack.c.h.b16 %v2767
        %v2812 = vunpack.c.l.b16 %v2768
        %v2813 = vunpack.c.h.b16 %v2768
        %v2814 = vunpack.c.l.b16 %v2769
        %v2815 = vunpack.c.h.b16 %v2769
        %v2816 = vunpack.c.l.b16 %v2770
        %v2817 = vunpack.c.h.b16 %v2770
        %v2818 = vunpack.c.l.b16 %v2771
        %v2819 = vunpack.c.h.b16 %v2771
        %v2820 = vpack.c.b16 %v2788, %v2788
        %v2821 = vpack.c.b16 %v2789, %v2789
        %v2822 = vpack.c.b16 %v2790, %v2790
        %v2823 = vpack.c.b16 %v2791, %v2791
        %v2824 = vpack.c.b16 %v2792, %v2792
        %v2825 = vpack.c.b16 %v2793, %v2793
        %v2826 = vpack.c.b16 %v2794, %v2794
        %v2827 = vpack.c.b16 %v2795, %v2795
        %v2828 = vpack.c.b16 %v2796, %v2796
        %v2829 = vpack.c.b16 %v2797, %v2797
        %v2830 = vpack.c.b16 %v2798, %v2798
        %v2831 = vpack.c.b16 %v2799, %v2799
        %v2832 = vpack.c.b16 %v2800, %v2800
        %v2833 = vpack.c.b16 %v2801, %v2801
        %v2834 = vpack.c.b16 %v2802, %v2802
        %v2835 = vpack.c.b16 %v2803, %v2803
        %v2836 = vpack.c.b16 %v2804, %v2804
        %v2837 = vpack.c.b16 %v2805, %v2805
        %v2838 = vpack.c.b16 %v2806, %v2806
        %v2839 = vpack.c.b16 %v2807, %v2807
        %v2840 = vpack.c.b16 %v2808, %v2808
        %v2841 = vpack.c.b16 %v2809, %v2809
        %v2842 = vpack.c.b16 %v2810, %v2810
        %v2843 = vpack.c.b16 %v2811, %v2811
        %v2844 = vpack.c.b16 %v2812, %v2812
        %v2845 = vpack.c.b16 %v2813, %v2813
        %v2846 = vpack.c.b16 %v2814, %v2814
        %v2847 = vpack.c.b16 %v2815, %v2815
        %v2848 = vpack.c.b16 %v2816, %v2816
        %v2849 = vpack.c.b16 %v2817, %v2817
        %v2850 = vpack.c.b16 %v2818, %v2818
        %v2851 = vpack.c.b16 %v2819, %v2819
        %2884 = vst [vmem:[%s207] sm:$0xf] %v2820
        %2885 = vst [vmem:[%s207 + $0x4] sm:$0xf] %v2821
        %2886 = vst [vmem:[%s207 + $0x8] sm:$0xf] %v2822
        %2887 = vst [vmem:[%s207 + $0xc] sm:$0xf] %v2823
        %2888 = vst [vmem:[%s207 + $0x10] sm:$0xf] %v2824
        %2889 = vst [vmem:[%s207 + $0x14] sm:$0xf] %v2825
        %2890 = vst [vmem:[%s207 + $0x18] sm:$0xf] %v2826
        %2891 = vst [vmem:[%s207 + $0x1c] sm:$0xf] %v2827
        %2892 = vst [vmem:[%s207 + $0x20] sm:$0xf] %v2828
        %2893 = vst [vmem:[%s207 + $0x24] sm:$0xf] %v2829
        %2894 = vst [vmem:[%s207 + $0x28] sm:$0xf] %v2830
        %2895 = vst [vmem:[%s207 + $0x2c] sm:$0xf] %v2831
        %2896 = vst [vmem:[%s207 + $0x30] sm:$0xf] %v2832
        %2897 = vst [vmem:[%s207 + $0x34] sm:$0xf] %v2833
        %2898 = vst [vmem:[%s207 + $0x38] sm:$0xf] %v2834
        %2899 = vst [vmem:[%s207 + $0x3c] sm:$0xf] %v2835
        %2900 = vst [vmem:[%s207 + $0x40] sm:$0xf] %v2836
        %2901 = vst [vmem:[%s207 + $0x44] sm:$0xf] %v2837
        %2902 = vst [vmem:[%s207 + $0x48] sm:$0xf] %v2838
        %2903 = vst [vmem:[%s207 + $0x4c] sm:$0xf] %v2839
        %2904 = vst [vmem:[%s207 + $0x50] sm:$0xf] %v2840
        %2905 = vst [vmem:[%s207 + $0x54] sm:$0xf] %v2841
        %2906 = vst [vmem:[%s207 + $0x58] sm:$0xf] %v2842
        %2907 = vst [vmem:[%s207 + $0x5c] sm:$0xf] %v2843
        %2908 = vst [vmem:[%s207 + $0x60] sm:$0xf] %v2844
        %2909 = vst [vmem:[%s207 + $0x64] sm:$0xf] %v2845
        %2910 = vst [vmem:[%s207 + $0x68] sm:$0xf] %v2846
        %2911 = vst [vmem:[%s207 + $0x6c] sm:$0xf] %v2847
        %2912 = vst [vmem:[%s207 + $0x70] sm:$0xf] %v2848
        %2913 = vst [vmem:[%s207 + $0x74] sm:$0xf] %v2849
        %2914 = vst [vmem:[%s207 + $0x78] sm:$0xf] %v2850
        %2915 = vst [vmem:[%s207 + $0x7c] sm:$0xf] %v2851
        %s2916 = sand.u32 %s80, 1
        %s2917 = scalar_lea.sflag [#allocation5], %s2916
        %s2918 = sand.u32 %s80, 1
        %s2919 = smul.addr %s2918, 128
        %s2920 = scalar_lea.vmem [#allocation8], %s2919
        %s2921 = sand.u32 %s106, 1
        %s2922 = scalar_lea.sflag [#allocation10], %s2921
        %s2923 = sand.u32 %s106, 1
        %s2924 = smul.addr %s2923, 2
        %s2925 = scalar_lea.vmem [#allocation9], %s2924
        // Predicated region
        $region37: #{tpu_custom_call.1} parent=27 // pred_check
          %p2926 = pneg %p90
        $region38: #{tpu_custom_call.1} parent=27 // pred_check_branch
          %2928 = sbr.rel (%p2926) target = $region40
        $region39: #{tpu_custom_call.1} parent=27 // pred_region
          %s2930 = ssub.s32 2048, 2048
          %2931 = vsyncadd %s2917, %s2930
          %s2932 = smul.addr %s25, 32
          %s2933 = smul.addr %s2932, 64
          %s2934 = scalar_lea.hbm %s2, %s2933
          %s2935 = sshll.u32 %s2920, 4
          %s2936 = int_to_ptr.vmem [resolvable:$true] %s2935
          %2941 = dma.vmem_to_hbm [thread:$0]  %s2936, 2048, %s2934, %s2917, 64, 64, 4
        $region40: #{tpu_custom_call.1} parent=27 // pred_fallthru
          _
        // Predicated region
        $region41: #{tpu_custom_call.1} parent=27 // pred_check
          %p2942 = pneg %p116
        $region42: #{tpu_custom_call.1} parent=27 // pred_check_branch
          %2944 = sbr.rel (%p2942) target = $region44
        $region43: #{tpu_custom_call.1} parent=27 // pred_region
          %s2946 = ssub.s32 32, 32
          %2947 = vsyncadd %s2922, %s2946
          %s2948 = smul.addr %s25, 32
          %s2949 = scalar_lea.hbm %s3, %s2948
          %s2951 = sshll.u32 %s2925, 4
          %s2952 = int_to_ptr.vmem [resolvable:$true] %s2951
          %2954 = dma.vmem_to_hbm [thread:$0]  %s2952, 32, %s2949, %s2922
        $region44: #{tpu_custom_call.1} parent=27 // pred_fallthru
          _
      $region28: #{tpu_custom_call.1} parent=5 // pred_fallthru
        _
      %p2955 = scmp.le.s32.totalorder 2, %s20
      // Predicated region
      $region45: #{tpu_custom_call.1} parent=5 // pred_check
        %p2956 = pneg %p2955
      $region46: #{tpu_custom_call.1} parent=5 // pred_check_branch
        %2958 = sbr.rel (%p2956) target = $region48
      $region47: #{tpu_custom_call.1} parent=5 // pred_region
        %s2959 = ssub.s32 %s20, 2
        // Predicated region
        $region49: #{tpu_custom_call.1} parent=47 // pred_check
          %p2960 = pneg %p96
        $region50: #{tpu_custom_call.1} parent=47 // pred_check_branch
          %2962 = sbr.rel (%p2960) target = $region52
        $region51: #{tpu_custom_call.1} parent=47 // pred_region
          %s2963 = sand.u32 %s81, 1
          %s2964 = scalar_lea.sflag [#allocation5], %s2963
          %s2965 = sand.u32 %s81, 1
          %s2966 = smul.addr %s2965, 128
          %s2967 = scalar_lea.vmem [#allocation8], %s2966
          %2968 = dma.done %s2964, 2048
        $region52: #{tpu_custom_call.1} parent=47 // pred_fallthru
          _
        // Predicated region
        $region53: #{tpu_custom_call.1} parent=47 // pred_check
          %p2969 = pneg %p122
        $region54: #{tpu_custom_call.1} parent=47 // pred_check_branch
          %2971 = sbr.rel (%p2969) target = $region56
        $region55: #{tpu_custom_call.1} parent=47 // pred_region
          %s2972 = sand.u32 %s107, 1
          %s2973 = scalar_lea.sflag [#allocation10], %s2972
          %s2974 = sand.u32 %s107, 1
          %s2975 = smul.addr %s2974, 2
          %s2976 = scalar_lea.vmem [#allocation9], %s2975
          %2977 = dma.done %s2973, 32
        $region56: #{tpu_custom_call.1} parent=47 // pred_fallthru
          _
      $region48: #{tpu_custom_call.1} parent=5 // pred_fallthru
        _
    $region6: #{tpu_custom_call.1} parent=1 // loop_footer
      %s24 = sadd.s32 1, %s20
    $region7: #{tpu_custom_call.1} parent=1 // loop_footer_branch
      %19 = sbr.rel target = $region3
    $region8: #{tpu_custom_call.1} parent=1 // loop_exit
      _
    %2978 = vsyncpa [#allocation4], 1
    %s2979 = scalar_lea.sflag [#allocation4], 1
    %2980 = vsyncpa %s2979, 1
    %2981 = vsyncpa [#allocation7], 1
    %2982 = vsyncpa [#allocation5], 1
    %s2983 = scalar_lea.sflag [#allocation5], 1
    %2984 = vsyncpa %s2983, 1
    %2985 = vsyncpa [#allocation10], 1
    %s2986 = scalar_lea.sflag [#allocation10], 1
    %2987 = vsyncpa %s2986, 1

</llo_original>
